<compile_context>
chip_gen: v7x
topology: tpu7x:2x2x1
jax: 0.10.0
libtpu: 0.0.40
codegen_flags: <defaults>
</compile_context>

<pallas_src>
import math

import jax
import jax.numpy as jnp
from jax.experimental import pallas as pl
from jax.experimental.pallas import tpu as pltpu


# ----------------------------- Pallas kernel ------------------------------ #
def _classifier_kernel(x_ref, emb_ref, w1x_ref, w1e_ref, b1_ref,
                       gamma_ref, beta_ref, w2_ref, b2_ref, out_ref):
    # Split projection: x @ W1[:H] + emb @ W1[H:] + b1.  MXU operands may be
    # bf16; accumulation is f32 via preferred_element_type.
    h = jnp.dot(x_ref[...], w1x_ref[...], preferred_element_type=jnp.float32)
    h = h + jnp.dot(emb_ref[...], w1e_ref[...],
                    preferred_element_type=jnp.float32)
    h = jnp.tanh(h + b1_ref[...])                       # f32 elementwise (EUP)

    # Fused LayerNorm statistics over the last dim (512), eps = 1e-5:
    # var = E[h^2] - mean^2 -> one elementwise pass + two back-to-back XLU
    # reductions.  Numerically safe since tanh output is bounded in [-1, 1].
    # Zero-padded batch rows give var = 0 -> rsqrt(1e-5): finite, sliced away.
    mean = jnp.mean(h, axis=-1, keepdims=True)
    msq = jnp.mean(h * h, axis=-1, keepdims=True)
    inv = jax.lax.rsqrt(msq - mean * mean + 1e-5)
    h = (h - mean) * inv * gamma_ref[...] + beta_ref[...]

    # Dropout: eval mode -> identity.
    # TODO(synk): training-mode per-language stochastic dropout not implemented.
    y = jnp.dot(h.astype(w2_ref.dtype), w2_ref[...],
                preferred_element_type=jnp.float32) + b2_ref[...]
    out_ref[...] = y.astype(out_ref.dtype)


# ------------------------------- wrapper ----------------------------------- #
def _round_up(n, m):
    return ((n + m - 1) // m) * m


def language_aware_classifier_fwd(x, lang_ids, params, *, block_rows=1024,
                                  matmul_dtype=jnp.bfloat16,
                                  out_dtype=jnp.float32):
    """Forward pass (eval mode). x: (B, hidden) f32, lang_ids: (B,) int.

    matmul_dtype=jnp.bfloat16 (default) runs the three contractions on the MXU
    in bf16 with f32 accumulation; pass jnp.float32 for a bit-accurate debug
    path.  For production, hidden_size should be a multiple of 128.
    """
    x = x.astype(jnp.float32)
    B, H = x.shape
    num_labels = params["b2"].shape[-1]
    D = params["b1"].shape[-1]          # 512
    E = params["lang_embed"].shape[-1]  # 64

    # -- glue: embedding gather (data-dependent, cheap) ----------------------
    lang_ids = jnp.clip(lang_ids.astype(jnp.int32), 0, 6)
    lang_emb = jnp.take(params["lang_embed"], lang_ids, axis=0)    # (B, 64)

    # -- batch tiling ----------------------------------------------------------
    # Align to 16 rows for bf16 sublane packing (8 suffices for f32); cap the
    # tile at ceil(B/2) so the grid has >= 2 steps whenever possible, letting
    # v7x's two TensorCores split the "parallel" batch axis.
    align = 8 if jnp.dtype(matmul_dtype).itemsize >= 4 else 16
    block_rows = max(align, (block_rows // align) * align)
    tb = min(block_rows, max(align, _round_up(-(-B // 2), align)))
    b_pad = _round_up(B, tb)
    if b_pad != B:
        x = jnp.pad(x, ((0, b_pad - B), (0, 0)))
        lang_emb = jnp.pad(lang_emb, ((0, b_pad - B), (0, 0)))

    # -- lane-dense output: pad the num_labels head to 128 columns ------------
    n_pad = _round_up(num_labels, 128)
    w2 = jnp.pad(params["w2"], ((0, 0), (0, n_pad - num_labels)))
    b2 = jnp.pad(params["b2"], ((0, 0), (0, n_pad - num_labels)))

    # Split W1 so no concatenated activation ever hits HBM.
    w1x = params["w1"][:H]                                         # (H, 512)
    w1e = params["w1"][H:]                                         # (64, 512)

    # MXU-operand cast (bf16 by default); biases / LN params stay f32.
    x_m = x.astype(matmul_dtype)
    emb_m = lang_emb.astype(matmul_dtype)
    w1x_m = w1x.astype(matmul_dtype)
    w1e_m = w1e.astype(matmul_dtype)
    w2_m = w2.astype(matmul_dtype)

    call_args = (x_m, emb_m, w1x_m, w1e_m,
                 params["b1"], params["ln_gamma"], params["ln_beta"], w2_m, b2)

    def run(single_buffer_weights):
        def resident(shape):
            if single_buffer_weights:
                # Constant block index -> no need to double-buffer; saves
                # several MiB of VMEM (matters most on v7x's 64 MiB budget).
                return pl.BlockSpec(shape, lambda i: (0, 0),
                                    pipeline_mode=pl.Buffered(1))
            return pl.BlockSpec(shape, lambda i: (0, 0))

        return pl.pallas_call(
            _classifier_kernel,
            out_shape=jax.ShapeDtypeStruct((b_pad, n_pad), out_dtype),
            grid=(b_pad // tb,),
            in_specs=[
                pl.BlockSpec((tb, H), lambda i: (i, 0)),   # x tile
                pl.BlockSpec((tb, E), lambda i: (i, 0)),   # lang_emb tile
                resident((H, D)),                          # W1[:H]   (resident)
                resident((E, D)),                          # W1[H:]   (resident)
                resident((1, D)),                          # b1
                resident((1, D)),                          # gamma
                resident((1, D)),                          # beta
                resident((D, n_pad)),                      # W2 (lane-padded)
                resident((1, n_pad)),                      # b2 (lane-padded)
            ],
            out_specs=pl.BlockSpec((tb, n_pad), lambda i: (i, 0)),
            compiler_params=pltpu.CompilerParams(
                dimension_semantics=("parallel",),
                vmem_limit_bytes=32 << 20),
        )(*call_args)

    try:
        out = run(single_buffer_weights=True)
    except Exception:
        # pipeline_mode=pl.Buffered(1) unsupported on this build -> default
        # double buffering (VMEM headroom is still ample at these tiles).
        out = run(single_buffer_weights=False)

    return out[:B, :num_labels]


# ------------------------- deterministic parameters ------------------------ #
def make_params(key, hidden_size, num_labels):
    k_emb, k_w1, k_w2 = jax.random.split(key, 3)

    def xavier_uniform(k, fan_in, fan_out):
        limit = math.sqrt(6.0 / (fan_in + fan_out))
        # stored as (in, out)  (transposed vs. torch's (out, in))
        return jax.random.uniform(k, (fan_in, fan_out), jnp.float32,
                                  -limit, limit)

    in1 = hidden_size + 64
    return {
        # nn.Embedding default init: N(0, 1)
        "lang_embed": jax.random.normal(k_emb, (7, 64), jnp.float32),
        "w1": xavier_uniform(k_w1, in1, 512),
        "b1": jnp.zeros((1, 512), jnp.float32),
        "ln_gamma": jnp.ones((1, 512), jnp.float32),
        "ln_beta": jnp.zeros((1, 512), jnp.float32),
        "w2": xavier_uniform(k_w2, 512, num_labels),
        "b2": jnp.zeros((1, num_labels), jnp.float32),
    }


# --------------------------- pure-JAX reference ---------------------------- #
def reference_fwd(x, lang_ids, params):
    lang_ids = jnp.clip(lang_ids.astype(jnp.int32), 0, 6)
    lang_emb = jnp.take(params["lang_embed"], lang_ids, axis=0)
    combined = jnp.concatenate([x, lang_emb], axis=1)
    h = jnp.tanh(combined @ params["w1"] + params["b1"])
    mean = jnp.mean(h, axis=-1, keepdims=True)
    var = jnp.mean((h - mean) ** 2, axis=-1, keepdims=True)
    h = (h - mean) * jax.lax.rsqrt(var + 1e-5)
    h = h * params["ln_gamma"] + params["ln_beta"]
    return h @ params["w2"] + params["b2"]


if __name__ == "__main__":
    HIDDEN = 32      # small hidden size for the demo (module default is 1024)
    NUM_LABELS = 6
    B = 4

    key = jax.random.PRNGKey(0)
    k_param, k_x, k_id = jax.random.split(key, 3)

    params = make_params(k_param, HIDDEN, NUM_LABELS)
    x = jax.random.normal(k_x, (B, HIDDEN), jnp.float32)
    lang_ids = jax.random.randint(k_id, (B,), 0, 7, dtype=jnp.int32)

    ref = reference_fwd(x, lang_ids, params)

    # Default fast path: bf16 MXU operands, f32 accumulate / LN / output.
    out = language_aware_classifier_fwd(x, lang_ids, params)
    out = jax.block_until_ready(out)
    assert out.shape == (B, NUM_LABELS)
    assert jnp.allclose(out, ref, atol=5e-2, rtol=5e-2), "bf16 path mismatch"

    # f32 debug path: tight check of the kernel structure.
    out_f32 = language_aware_classifier_fwd(x, lang_ids, params,
                                            matmul_dtype=jnp.float32)
    out_f32 = jax.block_until_ready(out_f32)
    assert jnp.allclose(out_f32, ref, atol=1e-4, rtol=1e-4), "f32 path mismatch"

    print("KERNEL_OK")
</pallas_src>

<mosaic_0001>
module attributes {stable_mosaic.version = 11 : i64} {
  func.func @_classifier_kernel(%arg0: i32, %arg1: memref<16x32xbf16, #tpu.memory_space<vmem>>, %arg2: memref<16x64xbf16, #tpu.memory_space<vmem>>, %arg3: memref<32x512xbf16, #tpu.memory_space<vmem>>, %arg4: memref<64x512xbf16, #tpu.memory_space<vmem>>, %arg5: memref<1x512xf32, #tpu.memory_space<vmem>>, %arg6: memref<1x512xf32, #tpu.memory_space<vmem>>, %arg7: memref<1x512xf32, #tpu.memory_space<vmem>>, %arg8: memref<512x128xbf16, #tpu.memory_space<vmem>>, %arg9: memref<1x128xf32, #tpu.memory_space<vmem>>, %arg10: memref<16x128xf32, #tpu.memory_space<vmem>>) attributes {dimension_semantics = [#tpu.dimension_semantics<parallel>], iteration_bounds = array<i64: 1>, scalar_prefetch = 0 : i64, scratch_operands = 0 : i64, tpu.core_type = #tpu.core_type<tc>, window_params = [{transform_indices = @transform_0, window_bounds = array<i64: 16, 32>}, {transform_indices = @transform_1, window_bounds = array<i64: 16, 64>}, {pipeline_mode = #tpu.pipeline_mode<synchronous>, transform_indices = @transform_2, window_bounds = array<i64: 32, 512>}, {pipeline_mode = #tpu.pipeline_mode<synchronous>, transform_indices = @transform_3, window_bounds = array<i64: 64, 512>}, {pipeline_mode = #tpu.pipeline_mode<synchronous>, transform_indices = @transform_4, window_bounds = array<i64: 1, 512>}, {pipeline_mode = #tpu.pipeline_mode<synchronous>, transform_indices = @transform_5, window_bounds = array<i64: 1, 512>}, {pipeline_mode = #tpu.pipeline_mode<synchronous>, transform_indices = @transform_6, window_bounds = array<i64: 1, 512>}, {pipeline_mode = #tpu.pipeline_mode<synchronous>, transform_indices = @transform_7, window_bounds = array<i64: 512, 128>}, {pipeline_mode = #tpu.pipeline_mode<synchronous>, transform_indices = @transform_8, window_bounds = array<i64: 1, 128>}, {transform_indices = @transform_9, window_bounds = array<i64: 16, 128>}]} {
    %c0 = arith.constant 0 : index
    %c0_0 = arith.constant 0 : index
    %0 = vector.load %arg1[%c0, %c0_0] : memref<16x32xbf16, #tpu.memory_space<vmem>>, vector<16x32xbf16>
    %c0_1 = arith.constant 0 : index
    %c0_2 = arith.constant 0 : index
    %1 = vector.load %arg3[%c0_1, %c0_2] : memref<32x512xbf16, #tpu.memory_space<vmem>>, vector<32x512xbf16>
    %cst = arith.constant dense<0.000000e+00> : vector<16x512xf32>
    %2 = tpu.matmul %0, %1, %cst {dimension_numbers = #tpu.dot_dimension_numbers<[1], [0], [0], [1], [0, 0, 1, 1], [], []>} : vector<16x32xbf16>, vector<32x512xbf16>, vector<16x512xf32> -> vector<16x512xf32>
    %c0_3 = arith.constant 0 : index
    %c0_4 = arith.constant 0 : index
    %3 = vector.load %arg2[%c0_3, %c0_4] : memref<16x64xbf16, #tpu.memory_space<vmem>>, vector<16x64xbf16>
    %c0_5 = arith.constant 0 : index
    %c0_6 = arith.constant 0 : index
    %4 = vector.load %arg4[%c0_5, %c0_6] : memref<64x512xbf16, #tpu.memory_space<vmem>>, vector<64x512xbf16>
    %cst_7 = arith.constant dense<0.000000e+00> : vector<16x512xf32>
    %5 = tpu.matmul %3, %4, %cst_7 {dimension_numbers = #tpu.dot_dimension_numbers<[1], [0], [0], [1], [0, 0, 1, 1], [], []>} : vector<16x64xbf16>, vector<64x512xbf16>, vector<16x512xf32> -> vector<16x512xf32>
    %6 = arith.addf %2, %5 : vector<16x512xf32>
    %c0_8 = arith.constant 0 : index
    %c0_9 = arith.constant 0 : index
    %7 = vector.load %arg5[%c0_8, %c0_9] : memref<1x512xf32, #tpu.memory_space<vmem>>, vector<1x512xf32>
    %8 = vector.broadcast %7 : vector<1x512xf32> to vector<16x512xf32>
    %9 = arith.addf %6, %8 : vector<16x512xf32>
    %10 = math.tanh %9 : vector<16x512xf32>
    %cst_10 = arith.constant dense<0.000000e+00> : vector<16xf32>
    %11 = vector.multi_reduction <add>, %10, %cst_10 [1] : vector<16x512xf32> to vector<16xf32>
    %12 = vector.shape_cast %11 : vector<16xf32> to vector<16x1xf32>
    %cst_11 = arith.constant 5.120000e+02 : f32
    %13 = vector.broadcast %cst_11 : f32 to vector<16x1xf32>
    %14 = arith.divf %12, %13 : vector<16x1xf32>
    %15 = arith.mulf %10, %10 : vector<16x512xf32>
    %cst_12 = arith.constant dense<0.000000e+00> : vector<16xf32>
    %16 = vector.multi_reduction <add>, %15, %cst_12 [1] : vector<16x512xf32> to vector<16xf32>
    %17 = vector.shape_cast %16 : vector<16xf32> to vector<16x1xf32>
    %cst_13 = arith.constant 5.120000e+02 : f32
    %18 = vector.broadcast %cst_13 : f32 to vector<16x1xf32>
    %19 = arith.divf %17, %18 : vector<16x1xf32>
    %20 = arith.mulf %14, %14 : vector<16x1xf32>
    %21 = arith.subf %19, %20 : vector<16x1xf32>
    %cst_14 = arith.constant 9.99999974E-6 : f32
    %22 = vector.broadcast %cst_14 : f32 to vector<16x1xf32>
    %23 = arith.addf %21, %22 : vector<16x1xf32>
    %24 = math.rsqrt %23 : vector<16x1xf32>
    %25 = vector.broadcast %14 : vector<16x1xf32> to vector<16x512xf32>
    %26 = arith.subf %10, %25 : vector<16x512xf32>
    %27 = vector.broadcast %24 : vector<16x1xf32> to vector<16x512xf32>
    %28 = arith.mulf %26, %27 : vector<16x512xf32>
    %c0_15 = arith.constant 0 : index
    %c0_16 = arith.constant 0 : index
    %29 = vector.load %arg6[%c0_15, %c0_16] : memref<1x512xf32, #tpu.memory_space<vmem>>, vector<1x512xf32>
    %30 = vector.broadcast %29 : vector<1x512xf32> to vector<16x512xf32>
    %31 = arith.mulf %28, %30 : vector<16x512xf32>
    %c0_17 = arith.constant 0 : index
    %c0_18 = arith.constant 0 : index
    %32 = vector.load %arg7[%c0_17, %c0_18] : memref<1x512xf32, #tpu.memory_space<vmem>>, vector<1x512xf32>
    %33 = vector.broadcast %32 : vector<1x512xf32> to vector<16x512xf32>
    %34 = arith.addf %31, %33 : vector<16x512xf32>
    %35 = arith.truncf %34 : vector<16x512xf32> to vector<16x512xbf16>
    %c0_19 = arith.constant 0 : index
    %c0_20 = arith.constant 0 : index
    %36 = vector.load %arg8[%c0_19, %c0_20] : memref<512x128xbf16, #tpu.memory_space<vmem>>, vector<512x128xbf16>
    %cst_21 = arith.constant dense<0.000000e+00> : vector<16x128xf32>
    %37 = tpu.matmul %35, %36, %cst_21 {dimension_numbers = #tpu.dot_dimension_numbers<[1], [0], [0], [1], [0, 0, 1, 1], [], []>} : vector<16x512xbf16>, vector<512x128xbf16>, vector<16x128xf32> -> vector<16x128xf32>
    %c0_22 = arith.constant 0 : index
    %c0_23 = arith.constant 0 : index
    %38 = vector.load %arg9[%c0_22, %c0_23] : memref<1x128xf32, #tpu.memory_space<vmem>>, vector<1x128xf32>
    %39 = vector.broadcast %38 : vector<1x128xf32> to vector<16x128xf32>
    %40 = arith.addf %37, %39 : vector<16x128xf32>
    %c0_24 = arith.constant 0 : index
    %c0_25 = arith.constant 0 : index
    %41 = vector.load %arg10[%c0_24, %c0_25] : memref<16x128xf32, #tpu.memory_space<vmem>>, vector<16x128xf32>
    tpu.vector_store %arg10[%c0_24, %c0_25], %40 {strides = array<i32>} : memref<16x128xf32, #tpu.memory_space<vmem>>, vector<16x128xf32>,
    return
  }
  func.func @transform_0(%arg0: i32) -> (i32, i32) {
    %c0_i32 = arith.constant 0 : i32
    %c0_i32_0 = arith.constant 0 : i32
    return %arg0, %c0_i32 : i32, i32
  }
  func.func @transform_1(%arg0: i32) -> (i32, i32) {
    %c0_i32 = arith.constant 0 : i32
    %c0_i32_0 = arith.constant 0 : i32
    return %arg0, %c0_i32 : i32, i32
  }
  func.func @transform_2(%arg0: i32) -> (i32, i32) {
    %c0_i32 = arith.constant 0 : i32
    %c0_i32_0 = arith.constant 0 : i32
    %c0_i32_1 = arith.constant 0 : i32
    return %c0_i32, %c0_i32_0 : i32, i32
  }
  func.func @transform_3(%arg0: i32) -> (i32, i32) {
    %c0_i32 = arith.constant 0 : i32
    %c0_i32_0 = arith.constant 0 : i32
    %c0_i32_1 = arith.constant 0 : i32
    return %c0_i32, %c0_i32_0 : i32, i32
  }
  func.func @transform_4(%arg0: i32) -> (i32, i32) {
    %c0_i32 = arith.constant 0 : i32
    %c0_i32_0 = arith.constant 0 : i32
    %c0_i32_1 = arith.constant 0 : i32
    return %c0_i32, %c0_i32_0 : i32, i32
  }
  func.func @transform_5(%arg0: i32) -> (i32, i32) {
    %c0_i32 = arith.constant 0 : i32
    %c0_i32_0 = arith.constant 0 : i32
    %c0_i32_1 = arith.constant 0 : i32
    return %c0_i32, %c0_i32_0 : i32, i32
  }
  func.func @transform_6(%arg0: i32) -> (i32, i32) {
    %c0_i32 = arith.constant 0 : i32
    %c0_i32_0 = arith.constant 0 : i32
    %c0_i32_1 = arith.constant 0 : i32
    return %c0_i32, %c0_i32_0 : i32, i32
  }
  func.func @transform_7(%arg0: i32) -> (i32, i32) {
    %c0_i32 = arith.constant 0 : i32
    %c0_i32_0 = arith.constant 0 : i32
    %c0_i32_1 = arith.constant 0 : i32
    return %c0_i32, %c0_i32_0 : i32, i32
  }
  func.func @transform_8(%arg0: i32) -> (i32, i32) {
    %c0_i32 = arith.constant 0 : i32
    %c0_i32_0 = arith.constant 0 : i32
    %c0_i32_1 = arith.constant 0 : i32
    return %c0_i32, %c0_i32_0 : i32, i32
  }
  func.func @transform_9(%arg0: i32) -> (i32, i32) {
    %c0_i32 = arith.constant 0 : i32
    %c0_i32_0 = arith.constant 0 : i32
    return %arg0, %c0_i32 : i32, i32
  }
}

module attributes {stable_mosaic.version = 11 : i64} {
  func.func @_classifier_kernel(%arg0: i32, %arg1: memref<16x32xbf16, #tpu.memory_space<vmem>>, %arg2: memref<16x64xbf16, #tpu.memory_space<vmem>>, %arg3: memref<32x512xbf16, #tpu.memory_space<vmem>>, %arg4: memref<64x512xbf16, #tpu.memory_space<vmem>>, %arg5: memref<1x512xf32, #tpu.memory_space<vmem>>, %arg6: memref<1x512xf32, #tpu.memory_space<vmem>>, %arg7: memref<1x512xf32, #tpu.memory_space<vmem>>, %arg8: memref<512x128xbf16, #tpu.memory_space<vmem>>, %arg9: memref<1x128xf32, #tpu.memory_space<vmem>>, %arg10: memref<16x128xf32, #tpu.memory_space<vmem>>) attributes {dimension_semantics = [#tpu.dimension_semantics<parallel>], iteration_bounds = array<i64: 1>, scalar_prefetch = 0 : i64, scratch_operands = 0 : i64, tpu.core_type = #tpu.core_type<tc>, window_params = [{transform_indices = @transform_0, window_bounds = array<i64: 16, 32>}, {transform_indices = @transform_1, window_bounds = array<i64: 16, 64>}, {pipeline_mode = #tpu.pipeline_mode<synchronous>, transform_indices = @transform_2, window_bounds = array<i64: 32, 512>}, {pipeline_mode = #tpu.pipeline_mode<synchronous>, transform_indices = @transform_3, window_bounds = array<i64: 64, 512>}, {pipeline_mode = #tpu.pipeline_mode<synchronous>, transform_indices = @transform_4, window_bounds = array<i64: 1, 512>}, {pipeline_mode = #tpu.pipeline_mode<synchronous>, transform_indices = @transform_5, window_bounds = array<i64: 1, 512>}, {pipeline_mode = #tpu.pipeline_mode<synchronous>, transform_indices = @transform_6, window_bounds = array<i64: 1, 512>}, {pipeline_mode = #tpu.pipeline_mode<synchronous>, transform_indices = @transform_7, window_bounds = array<i64: 512, 128>}, {pipeline_mode = #tpu.pipeline_mode<synchronous>, transform_indices = @transform_8, window_bounds = array<i64: 1, 128>}, {transform_indices = @transform_9, window_bounds = array<i64: 16, 128>}]} {
    %c0 = arith.constant 0 : index
    %c0_0 = arith.constant 0 : index
    %0 = vector.load %arg1[%c0, %c0_0] : memref<16x32xbf16, #tpu.memory_space<vmem>>, vector<16x32xbf16>
    %c0_1 = arith.constant 0 : index
    %c0_2 = arith.constant 0 : index
    %1 = vector.load %arg3[%c0_1, %c0_2] : memref<32x512xbf16, #tpu.memory_space<vmem>>, vector<32x512xbf16>
    %cst = arith.constant dense<0.000000e+00> : vector<16x512xf32>
    %2 = tpu.matmul %0, %1, %cst {dimension_numbers = #tpu.dot_dimension_numbers<[1], [0], [0], [1], [0, 0, 1, 1], [], []>} : vector<16x32xbf16>, vector<32x512xbf16>, vector<16x512xf32> -> vector<16x512xf32>
    %c0_3 = arith.constant 0 : index
    %c0_4 = arith.constant 0 : index
    %3 = vector.load %arg2[%c0_3, %c0_4] : memref<16x64xbf16, #tpu.memory_space<vmem>>, vector<16x64xbf16>
    %c0_5 = arith.constant 0 : index
    %c0_6 = arith.constant 0 : index
    %4 = vector.load %arg4[%c0_5, %c0_6] : memref<64x512xbf16, #tpu.memory_space<vmem>>, vector<64x512xbf16>
    %cst_7 = arith.constant dense<0.000000e+00> : vector<16x512xf32>
    %5 = tpu.matmul %3, %4, %cst_7 {dimension_numbers = #tpu.dot_dimension_numbers<[1], [0], [0], [1], [0, 0, 1, 1], [], []>} : vector<16x64xbf16>, vector<64x512xbf16>, vector<16x512xf32> -> vector<16x512xf32>
    %6 = arith.addf %2, %5 : vector<16x512xf32>
    %c0_8 = arith.constant 0 : index
    %c0_9 = arith.constant 0 : index
    %7 = vector.load %arg5[%c0_8, %c0_9] : memref<1x512xf32, #tpu.memory_space<vmem>>, vector<1x512xf32>
    %8 = vector.broadcast %7 : vector<1x512xf32> to vector<16x512xf32>
    %9 = arith.addf %6, %8 : vector<16x512xf32>
    %10 = math.tanh %9 : vector<16x512xf32>
    %cst_10 = arith.constant dense<0.000000e+00> : vector<16xf32>
    %11 = vector.multi_reduction <add>, %10, %cst_10 [1] : vector<16x512xf32> to vector<16xf32>
    %12 = vector.shape_cast %11 : vector<16xf32> to vector<16x1xf32>
    %cst_11 = arith.constant 5.120000e+02 : f32
    %13 = vector.broadcast %cst_11 : f32 to vector<16x1xf32>
    %14 = arith.divf %12, %13 : vector<16x1xf32>
    %15 = arith.mulf %10, %10 : vector<16x512xf32>
    %cst_12 = arith.constant dense<0.000000e+00> : vector<16xf32>
    %16 = vector.multi_reduction <add>, %15, %cst_12 [1] : vector<16x512xf32> to vector<16xf32>
    %17 = vector.shape_cast %16 : vector<16xf32> to vector<16x1xf32>
    %cst_13 = arith.constant 5.120000e+02 : f32
    %18 = vector.broadcast %cst_13 : f32 to vector<16x1xf32>
    %19 = arith.divf %17, %18 : vector<16x1xf32>
    %20 = arith.mulf %14, %14 : vector<16x1xf32>
    %21 = arith.subf %19, %20 : vector<16x1xf32>
    %cst_14 = arith.constant 9.99999974E-6 : f32
    %22 = vector.broadcast %cst_14 : f32 to vector<16x1xf32>
    %23 = arith.addf %21, %22 : vector<16x1xf32>
    %24 = math.rsqrt %23 : vector<16x1xf32>
    %25 = vector.broadcast %14 : vector<16x1xf32> to vector<16x512xf32>
    %26 = arith.subf %10, %25 : vector<16x512xf32>
    %27 = vector.broadcast %24 : vector<16x1xf32> to vector<16x512xf32>
    %28 = arith.mulf %26, %27 : vector<16x512xf32>
    %c0_15 = arith.constant 0 : index
    %c0_16 = arith.constant 0 : index
    %29 = vector.load %arg6[%c0_15, %c0_16] : memref<1x512xf32, #tpu.memory_space<vmem>>, vector<1x512xf32>
    %30 = vector.broadcast %29 : vector<1x512xf32> to vector<16x512xf32>
    %31 = arith.mulf %28, %30 : vector<16x512xf32>
    %c0_17 = arith.constant 0 : index
    %c0_18 = arith.constant 0 : index
    %32 = vector.load %arg7[%c0_17, %c0_18] : memref<1x512xf32, #tpu.memory_space<vmem>>, vector<1x512xf32>
    %33 = vector.broadcast %32 : vector<1x512xf32> to vector<16x512xf32>
    %34 = arith.addf %31, %33 : vector<16x512xf32>
    %35 = arith.truncf %34 : vector<16x512xf32> to vector<16x512xbf16>
    %c0_19 = arith.constant 0 : index
    %c0_20 = arith.constant 0 : index
    %36 = vector.load %arg8[%c0_19, %c0_20] : memref<512x128xbf16, #tpu.memory_space<vmem>>, vector<512x128xbf16>
    %cst_21 = arith.constant dense<0.000000e+00> : vector<16x128xf32>
    %37 = tpu.matmul %35, %36, %cst_21 {dimension_numbers = #tpu.dot_dimension_numbers<[1], [0], [0], [1], [0, 0, 1, 1], [], []>} : vector<16x512xbf16>, vector<512x128xbf16>, vector<16x128xf32> -> vector<16x128xf32>
    %c0_22 = arith.constant 0 : index
    %c0_23 = arith.constant 0 : index
    %38 = vector.load %arg9[%c0_22, %c0_23] : memref<1x128xf32, #tpu.memory_space<vmem>>, vector<1x128xf32>
    %39 = vector.broadcast %38 : vector<1x128xf32> to vector<16x128xf32>
    %40 = arith.addf %37, %39 : vector<16x128xf32>
    %c0_24 = arith.constant 0 : index
    %c0_25 = arith.constant 0 : index
    %41 = vector.load %arg10[%c0_24, %c0_25] : memref<16x128xf32, #tpu.memory_space<vmem>>, vector<16x128xf32>
    tpu.vector_store %arg10[%c0_24, %c0_25], %40 {strides = array<i32>} : memref<16x128xf32, #tpu.memory_space<vmem>>, vector<16x128xf32>,
    return
  }
  func.func @transform_0(%arg0: i32) -> (i32, i32) {
    %c0_i32 = arith.constant 0 : i32
    %c0_i32_0 = arith.constant 0 : i32
    return %arg0, %c0_i32 : i32, i32
  }
  func.func @transform_1(%arg0: i32) -> (i32, i32) {
    %c0_i32 = arith.constant 0 : i32
    %c0_i32_0 = arith.constant 0 : i32
    return %arg0, %c0_i32 : i32, i32
  }
  func.func @transform_2(%arg0: i32) -> (i32, i32) {
    %c0_i32 = arith.constant 0 : i32
    %c0_i32_0 = arith.constant 0 : i32
    %c0_i32_1 = arith.constant 0 : i32
    return %c0_i32, %c0_i32_0 : i32, i32
  }
  func.func @transform_3(%arg0: i32) -> (i32, i32) {
    %c0_i32 = arith.constant 0 : i32
    %c0_i32_0 = arith.constant 0 : i32
    %c0_i32_1 = arith.constant 0 : i32
    return %c0_i32, %c0_i32_0 : i32, i32
  }
  func.func @transform_4(%arg0: i32) -> (i32, i32) {
    %c0_i32 = arith.constant 0 : i32
    %c0_i32_0 = arith.constant 0 : i32
    %c0_i32_1 = arith.constant 0 : i32
    return %c0_i32, %c0_i32_0 : i32, i32
  }
  func.func @transform_5(%arg0: i32) -> (i32, i32) {
    %c0_i32 = arith.constant 0 : i32
    %c0_i32_0 = arith.constant 0 : i32
    %c0_i32_1 = arith.constant 0 : i32
    return %c0_i32, %c0_i32_0 : i32, i32
  }
  func.func @transform_6(%arg0: i32) -> (i32, i32) {
    %c0_i32 = arith.constant 0 : i32
    %c0_i32_0 = arith.constant 0 : i32
    %c0_i32_1 = arith.constant 0 : i32
    return %c0_i32, %c0_i32_0 : i32, i32
  }
  func.func @transform_7(%arg0: i32) -> (i32, i32) {
    %c0_i32 = arith.constant 0 : i32
    %c0_i32_0 = arith.constant 0 : i32
    %c0_i32_1 = arith.constant 0 : i32
    return %c0_i32, %c0_i32_0 : i32, i32
  }
  func.func @transform_8(%arg0: i32) -> (i32, i32) {
    %c0_i32 = arith.constant 0 : i32
    %c0_i32_0 = arith.constant 0 : i32
    %c0_i32_1 = arith.constant 0 : i32
    return %c0_i32, %c0_i32_0 : i32, i32
  }
  func.func @transform_9(%arg0: i32) -> (i32, i32) {
    %c0_i32 = arith.constant 0 : i32
    %c0_i32_0 = arith.constant 0 : i32
    return %arg0, %c0_i32 : i32, i32
  }
}

</mosaic_0001>

<llo_original>
// kernel: tpu_custom_call.1
$region0: #{tpu_custom_call.1}
  #allocation0 [shape = 'u32[]', space=smem, size = 0x4, offset = 0x4, fixed_abs, tag = 'smem constant byte address 0x4 - core index']
  #allocation1 [shape = 'u32[144,128]{1,0:T(1,128)}', space=vmem, size = 0x12000, scoped, tag = 'internal scratch']
  %s0 = inlined_call_operand.hbm [shape: bf16[16,32], index: 0, kind: input, shape index: {}]
  %s1 = inlined_call_operand.hbm [shape: bf16[16,64], index: 1, kind: input, shape index: {}]
  %s2 = inlined_call_operand.hbm [shape: bf16[32,512], index: 2, kind: input, shape index: {}]
  %s3 = inlined_call_operand.hbm [shape: bf16[64,512], index: 3, kind: input, shape index: {}]
  %s4 = inlined_call_operand.vmem [shape: f32[1,512], index: 4, kind: input, shape index: {}]
  %s5 = inlined_call_operand.vmem [shape: f32[1,512], index: 5, kind: input, shape index: {}]
  %s6 = inlined_call_operand.vmem [shape: f32[1,512], index: 6, kind: input, shape index: {}]
  %s7 = inlined_call_operand.hbm [shape: bf16[512,128], index: 7, kind: input, shape index: {}]
  %s8 = inlined_call_operand.vmem [shape: f32[1,128], index: 8, kind: input, shape index: {}]
  %s9 = inlined_call_operand.hbm [shape: f32[16,128], index: 9, kind: output, shape index: {}]
  %s10 = sld [smem:[#allocation0]]
  $region66: #{tpu_custom_call.1} parent=0
    _
  %s12 = ssub.s32 1, %s10
  %s13 = scalar_select 0, %s12, %s10
  $region1: #{tpu_custom_call.1} parent=0
    #allocation2 [shape = 'u8[4096]{0}', space=vmem, size = 0x1000, scoped, tag = 'input window, operand 0, single buffered']
    #allocation3 [shape = 's32[1]{0}', space=sflag, size = 0x4, scoped, tag = 'scoped memory for tpu_custom_call.1']
    #allocation4 [shape = 's32[1]{0}', space=sflag, size = 0x4, scoped, tag = 'scoped memory for tpu_custom_call.1']
    #allocation5 [shape = 'u8[4096]{0}', space=vmem, size = 0x1000, scoped, tag = 'input window, operand 1, single buffered']
    #allocation6 [shape = 's32[1]{0}', space=sflag, size = 0x4, scoped, tag = 'scoped memory for tpu_custom_call.1']
    #allocation7 [shape = 'u8[32768]{0}', space=vmem, size = 0x8000, scoped, tag = 'input window, operand 2, single buffered']
    #allocation8 [shape = 'u8[65536]{0}', space=vmem, size = 0x10000, scoped, tag = 'input window, operand 3, single buffered']
    #allocation9 [shape = 's32[1]{0}', space=sflag, size = 0x4, scoped, tag = 'scoped memory for tpu_custom_call.1']
    #allocation10 [shape = 'u8[131072]{0}', space=vmem, size = 0x20000, scoped, tag = 'input window, operand 7, single buffered']
    #allocation11 [shape = 'u8[8192]{0}', space=vmem, size = 0x2000, scoped, tag = 'output window, operand 0, single buffered']
    %14 = vsyncpa [#allocation3], 0
    %15 = vsyncpa [#allocation6], 0
    %16 = vsyncpa [#allocation9], 0
    %17 = vsyncpa [#allocation4], 0
    // Predicated region
    $region2: #{tpu_custom_call.1} parent=1 // pred_check
      _
    $region3: #{tpu_custom_call.1} parent=1 // pred_check_branch
      %19 = sbr.rel (0) target = $region5
    $region4: #{tpu_custom_call.1} parent=1 // pred_region
      %s21 = ssub.s32 128, 128
      %22 = vsyncadd [#allocation3], %s21
      %s23 = sshll.u32 [#allocation2], 4
      %s24 = int_to_ptr.vmem [resolvable:$true] %s23
      %29 = dma.hbm_to_vmem [thread:$0]  %s0, 128, %s24, [#allocation3], 64, 64, 4
    $region5: #{tpu_custom_call.1} parent=1 // pred_fallthru
      _
    // Predicated region
    $region6: #{tpu_custom_call.1} parent=1 // pred_check
      _
    $region7: #{tpu_custom_call.1} parent=1 // pred_check_branch
      %31 = sbr.rel (0) target = $region9
    $region8: #{tpu_custom_call.1} parent=1 // pred_region
      %s33 = ssub.s32 128, 128
      %34 = vsyncadd [#allocation6], %s33
      %s35 = sshll.u32 [#allocation5], 4
      %s36 = int_to_ptr.vmem [resolvable:$true] %s35
      %41 = dma.hbm_to_vmem [thread:$0]  %s1, 128, %s36, [#allocation6], 64, 64, 4
    $region9: #{tpu_custom_call.1} parent=1 // pred_fallthru
      _
    // Predicated region
    $region10: #{tpu_custom_call.1} parent=1 // pred_check
      _
    $region11: #{tpu_custom_call.1} parent=1 // pred_check_branch
      %43 = sbr.rel (0) target = $region13
    $region12: #{tpu_custom_call.1} parent=1 // pred_region
      %s45 = ssub.s32 1024, 1024
      %46 = vsyncadd [#allocation6], %s45
      %s47 = sshll.u32 [#allocation7], 4
      %s48 = int_to_ptr.vmem [resolvable:$true] %s47
      %53 = dma.hbm_to_vmem [thread:$0]  %s2, 1024, %s48, [#allocation6], 256, 256, 16
    $region13: #{tpu_custom_call.1} parent=1 // pred_fallthru
      _
    // Predicated region
    $region14: #{tpu_custom_call.1} parent=1 // pred_check
      _
    $region15: #{tpu_custom_call.1} parent=1 // pred_check_branch
      %55 = sbr.rel (0) target = $region17
    $region16: #{tpu_custom_call.1} parent=1 // pred_region
      %s57 = ssub.s32 2048, 2048
      %58 = vsyncadd [#allocation9], %s57
      %s59 = sshll.u32 [#allocation8], 4
      %s60 = int_to_ptr.vmem [resolvable:$true] %s59
      %65 = dma.hbm_to_vmem [thread:$0]  %s3, 2048, %s60, [#allocation9], 256, 256, 16
    $region17: #{tpu_custom_call.1} parent=1 // pred_fallthru
      _
    // Predicated region
    $region18: #{tpu_custom_call.1} parent=1 // pred_check
      _
    $region19: #{tpu_custom_call.1} parent=1 // pred_check_branch
      %67 = sbr.rel (0) target = $region21
    $region20: #{tpu_custom_call.1} parent=1 // pred_region
      _
    $region21: #{tpu_custom_call.1} parent=1 // pred_fallthru
      _
    // Predicated region
    $region22: #{tpu_custom_call.1} parent=1 // pred_check
      _
    $region23: #{tpu_custom_call.1} parent=1 // pred_check_branch
      %69 = sbr.rel (0) target = $region25
    $region24: #{tpu_custom_call.1} parent=1 // pred_region
      _
    $region25: #{tpu_custom_call.1} parent=1 // pred_fallthru
      _
    // Predicated region
    $region26: #{tpu_custom_call.1} parent=1 // pred_check
      _
    $region27: #{tpu_custom_call.1} parent=1 // pred_check_branch
      %71 = sbr.rel (0) target = $region29
    $region28: #{tpu_custom_call.1} parent=1 // pred_region
      _
    $region29: #{tpu_custom_call.1} parent=1 // pred_fallthru
      _
    // Predicated region
    $region30: #{tpu_custom_call.1} parent=1 // pred_check
      _
    $region31: #{tpu_custom_call.1} parent=1 // pred_check_branch
      %73 = sbr.rel (0) target = $region33
    $region32: #{tpu_custom_call.1} parent=1 // pred_region
      %s75 = ssub.s32 4096, 4096
      %76 = vsyncadd [#allocation9], %s75
      %s77 = sshll.u32 [#allocation10], 4
      %s78 = int_to_ptr.vmem [resolvable:$true] %s77
      %83 = dma.hbm_to_vmem [thread:$0]  %s7, 4096, %s78, [#allocation9], 64, 64, 4
    $region33: #{tpu_custom_call.1} parent=1 // pred_fallthru
      _
    // Predicated region
    $region34: #{tpu_custom_call.1} parent=1 // pred_check
      _
    $region35: #{tpu_custom_call.1} parent=1 // pred_check_branch
      %85 = sbr.rel (0) target = $region37
    $region36: #{tpu_custom_call.1} parent=1 // pred_region
      _
    $region37: #{tpu_custom_call.1} parent=1 // pred_fallthru
      _
    // Predicated region
    $region38: #{tpu_custom_call.1} parent=1 // pred_check
      _
    $region39: #{tpu_custom_call.1} parent=1 // pred_check_branch
      %87 = sbr.rel (0) target = $region41
    $region40: #{tpu_custom_call.1} parent=1 // pred_region
      %88 = dma.done [#allocation3], 128
    $region41: #{tpu_custom_call.1} parent=1 // pred_fallthru
      _
    // Predicated region
    $region42: #{tpu_custom_call.1} parent=1 // pred_check
      _
    $region43: #{tpu_custom_call.1} parent=1 // pred_check_branch
      %90 = sbr.rel (0) target = $region45
    $region44: #{tpu_custom_call.1} parent=1 // pred_region
      %91 = dma.done [#allocation6], 128
    $region45: #{tpu_custom_call.1} parent=1 // pred_fallthru
      _
    // Predicated region
    $region46: #{tpu_custom_call.1} parent=1 // pred_check
      _
    $region47: #{tpu_custom_call.1} parent=1 // pred_check_branch
      %93 = sbr.rel (0) target = $region49
    $region48: #{tpu_custom_call.1} parent=1 // pred_region
      %94 = dma.done [#allocation6], 1024
    $region49: #{tpu_custom_call.1} parent=1 // pred_fallthru
      _
    // Predicated region
    $region50: #{tpu_custom_call.1} parent=1 // pred_check
      _
    $region51: #{tpu_custom_call.1} parent=1 // pred_check_branch
      %96 = sbr.rel (0) target = $region53
    $region52: #{tpu_custom_call.1} parent=1 // pred_region
      %97 = dma.done [#allocation9], 2048
    $region53: #{tpu_custom_call.1} parent=1 // pred_fallthru
      _
    // Predicated region
    $region54: #{tpu_custom_call.1} parent=1 // pred_check
      _
    $region55: #{tpu_custom_call.1} parent=1 // pred_check_branch
      %99 = sbr.rel (0) target = $region57
    $region56: #{tpu_custom_call.1} parent=1 // pred_region
      %100 = dma.done [#allocation9], 4096
    $region57: #{tpu_custom_call.1} parent=1 // pred_fallthru
      _
    %v102 = vld [vmem:[#allocation2] sm:$0xf]
    %v103 = vld [vmem:[#allocation2 + $0x4] sm:$0xf]
    %v104 = vld [vmem:[#allocation7] sm:$0xff]
    %v105 = vld [vmem:[#allocation7 + $0x8] sm:$0xff]
    %v106 = vld [vmem:[#allocation7 + $0x10] sm:$0xff]
    %v107 = vld [vmem:[#allocation7 + $0x18] sm:$0xff]
    %v108 = vld [vmem:[#allocation7 + $0x20] sm:$0xff]
    %v109 = vld [vmem:[#allocation7 + $0x28] sm:$0xff]
    %v110 = vld [vmem:[#allocation7 + $0x30] sm:$0xff]
    %v111 = vld [vmem:[#allocation7 + $0x38] sm:$0xff]
    %v112 = vld [vmem:[#allocation5] sm:$0xf]
    %v113 = vld [vmem:[#allocation5 + $0x4] sm:$0xf]
    %v114 = vld [vmem:[#allocation8] sm:$0xff]
    %v115 = vld [vmem:[#allocation8 + $0x8] sm:$0xff]
    %v116 = vld [vmem:[#allocation8 + $0x10] sm:$0xff]
    %v117 = vld [vmem:[#allocation8 + $0x18] sm:$0xff]
    %v118 = vld [vmem:[#allocation8 + $0x20] sm:$0xff]
    %v119 = vld [vmem:[#allocation8 + $0x28] sm:$0xff]
    %v120 = vld [vmem:[#allocation8 + $0x30] sm:$0xff]
    %v121 = vld [vmem:[#allocation8 + $0x38] sm:$0xff]
    %v122 = vld [vmem:[#allocation8 + $0x40] sm:$0xff]
    %v123 = vld [vmem:[#allocation8 + $0x48] sm:$0xff]
    %v124 = vld [vmem:[#allocation8 + $0x50] sm:$0xff]
    %v125 = vld [vmem:[#allocation8 + $0x58] sm:$0xff]
    %v126 = vld [vmem:[#allocation8 + $0x60] sm:$0xff]
    %v127 = vld [vmem:[#allocation8 + $0x68] sm:$0xff]
    %v128 = vld [vmem:[#allocation8 + $0x70] sm:$0xff]
    %v129 = vld [vmem:[#allocation8 + $0x78] sm:$0xff]
    %v132 = vunpack.c.l.b16 %v112
    %v133 = vunpack.c.l.b16 %v113
    %v134 = vpack.c.b16 %v133, %v132
    %v151 = vunpack.c.l.b16 %v114
    %v152 = vunpack.c.h.b16 %v114
    %v153 = vunpack.c.l.b16 %v115
    %v154 = vunpack.c.h.b16 %v115
    %v155 = vunpack.c.l.b16 %v116
    %v156 = vunpack.c.h.b16 %v116
    %v157 = vunpack.c.l.b16 %v117
    %v158 = vunpack.c.h.b16 %v117
    %v159 = vunpack.c.l.b16 %v118
    %v160 = vunpack.c.h.b16 %v118
    %v161 = vunpack.c.l.b16 %v119
    %v162 = vunpack.c.h.b16 %v119
    %v163 = vunpack.c.l.b16 %v120
    %v164 = vunpack.c.h.b16 %v120
    %v165 = vunpack.c.l.b16 %v121
    %v166 = vunpack.c.h.b16 %v121
    %v167 = vunpack.c.l.b16 %v122
    %v168 = vunpack.c.h.b16 %v122
    %v169 = vunpack.c.l.b16 %v123
    %v170 = vunpack.c.h.b16 %v123
    %v171 = vunpack.c.l.b16 %v124
    %v172 = vunpack.c.h.b16 %v124
    %v173 = vunpack.c.l.b16 %v125
    %v174 = vunpack.c.h.b16 %v125
    %v175 = vunpack.c.l.b16 %v126
    %v176 = vunpack.c.h.b16 %v126
    %v177 = vunpack.c.l.b16 %v127
    %v178 = vunpack.c.h.b16 %v127
    %v179 = vunpack.c.l.b16 %v128
    %v180 = vunpack.c.h.b16 %v128
    %v181 = vunpack.c.l.b16 %v129
    %v182 = vunpack.c.h.b16 %v129
    %v183 = vpack.c.b16 %v155, %v151
    %v184 = vpack.c.b16 %v156, %v152
    %v185 = vpack.c.b16 %v157, %v153
    %v186 = vpack.c.b16 %v158, %v154
    %v187 = vpack.c.b16 %v163, %v159
    %v188 = vpack.c.b16 %v164, %v160
    %v189 = vpack.c.b16 %v165, %v161
    %v190 = vpack.c.b16 %v166, %v162
    %v191 = vpack.c.b16 %v171, %v167
    %v192 = vpack.c.b16 %v172, %v168
    %v193 = vpack.c.b16 %v173, %v169
    %v194 = vpack.c.b16 %v174, %v170
    %v195 = vpack.c.b16 %v179, %v175
    %v196 = vpack.c.b16 %v180, %v176
    %v197 = vpack.c.b16 %v181, %v177
    %v198 = vpack.c.b16 %v182, %v178
    %vm215 = vcmask 523264
    %v217 = vsel %vm215, %v134, 0
    %219 = vmatprep.subr.bf16.mxu0 %v184
    %220 = vmatpush1.bf16.msra.mxu0 %v183
    %221 = vmatprep.subr.bf16.mxu0 %v188
    %222 = vmatpush1.bf16.msra.mxu0 %v187
    %223 = vmatprep.subr.bf16.mxu0 %v192
    %224 = vmatpush1.bf16.msra.mxu0 %v191
    %225 = vmatprep.subr.bf16.mxu0 %v196
    %226 = vmatpush1.bf16.msra.mxu0 %v195
    %227 = vmatprep.subr.bf16.mxu0 0
    %228 = vmatpush1.bf16.msra.mxu0 0
    %229 = vmatprep.subr.bf16.mxu0 0
    %230 = vmatpush1.bf16.msra.mxu0 0
    %231 = vmatprep.subr.bf16.mxu0 0
    %232 = vmatpush1.bf16.msra.mxu0 0
    %233 = vmatprep.subr.bf16.mxu0 0
    %234 = vmatpush1.bf16.msra.mxu0 0
    %235 = vmatprep.subr.bf16.mxu0 0
    %236 = vmatpush1.bf16.msra.mxu0 0
    %237 = vmatprep.subr.bf16.mxu0 0
    %238 = vmatpush1.bf16.msra.mxu0 0
    %239 = vmatprep.subr.bf16.mxu0 0
    %240 = vmatpush1.bf16.msra.mxu0 0
    %241 = vmatprep.subr.bf16.mxu0 0
    %242 = vmatpush1.bf16.msra.mxu0 0
    %243 = vmatprep.subr.bf16.mxu0 0
    %244 = vmatpush1.bf16.msra.mxu0 0
    %245 = vmatprep.subr.bf16.mxu0 0
    %246 = vmatpush1.bf16.msra.mxu0 0
    %247 = vmatprep.subr.bf16.mxu0 0
    %248 = vmatpush1.bf16.msra.mxu0 0
    %249 = vmatprep.subr.bf16.mxu0 0
    %250 = vmatpush1.bf16.msra.mxu0 0
    %251 = vmatprep.mubr.bf16.mxu0 0
    %252 = vmatmul.mubr.bf16.gmra.mrb[0].mxu0 %v217
    %v253 = vpop.f32.mrb[0].mxu0
    %v254 = vadd.f32 0.0, %v253
    %v255 = vpop.f32.mrb[0].mxu0
    %v256 = vadd.f32 0.0, %v255
    %v257 = vpop.f32.mrb[0].mxu0
    %v258 = vadd.f32 0.0, %v257
    %v259 = vpop.f32.mrb[0].mxu0
    %v260 = vadd.f32 0.0, %v259
    %261 = vdwg.mxu0
    %262 = vmatprep.subr.bf16.mxu0 %v186
    %263 = vmatpush1.bf16.msra.mxu0 %v185
    %264 = vmatprep.subr.bf16.mxu0 %v190
    %265 = vmatpush1.bf16.msra.mxu0 %v189
    %266 = vmatprep.subr.bf16.mxu0 %v194
    %267 = vmatpush1.bf16.msra.mxu0 %v193
    %268 = vmatprep.subr.bf16.mxu0 %v198
    %269 = vmatpush1.bf16.msra.mxu0 %v197
    %270 = vmatprep.subr.bf16.mxu0 0
    %271 = vmatpush1.bf16.msra.mxu0 0
    %272 = vmatprep.subr.bf16.mxu0 0
    %273 = vmatpush1.bf16.msra.mxu0 0
    %274 = vmatprep.subr.bf16.mxu0 0
    %275 = vmatpush1.bf16.msra.mxu0 0
    %276 = vmatprep.subr.bf16.mxu0 0
    %277 = vmatpush1.bf16.msra.mxu0 0
    %278 = vmatprep.subr.bf16.mxu0 0
    %279 = vmatpush1.bf16.msra.mxu0 0
    %280 = vmatprep.subr.bf16.mxu0 0
    %281 = vmatpush1.bf16.msra.mxu0 0
    %282 = vmatprep.subr.bf16.mxu0 0
    %283 = vmatpush1.bf16.msra.mxu0 0
    %284 = vmatprep.subr.bf16.mxu0 0
    %285 = vmatpush1.bf16.msra.mxu0 0
    %286 = vmatprep.subr.bf16.mxu0 0
    %287 = vmatpush1.bf16.msra.mxu0 0
    %288 = vmatprep.subr.bf16.mxu0 0
    %289 = vmatpush1.bf16.msra.mxu0 0
    %290 = vmatprep.subr.bf16.mxu0 0
    %291 = vmatpush1.bf16.msra.mxu0 0
    %292 = vmatprep.subr.bf16.mxu0 0
    %293 = vmatpush1.bf16.msra.mxu0 0
    %294 = vmatprep.mubr.bf16.mxu0 0
    %295 = vmatmul.mubr.bf16.gmra.mrb[0].mxu0 %v217
    %v296 = vpop.f32.mrb[0].mxu0
    %v297 = vadd.f32 0.0, %v296
    %v298 = vpop.f32.mrb[0].mxu0
    %v299 = vadd.f32 0.0, %v298
    %v300 = vpop.f32.mrb[0].mxu0
    %v301 = vadd.f32 0.0, %v300
    %v302 = vpop.f32.mrb[0].mxu0
    %v303 = vadd.f32 0.0, %v302
    %304 = vdwg.mxu0
    %v307 = vunpack.c.l.b16 %v102
    %v308 = vunpack.c.l.b16 %v103
    %v309 = vpack.c.b16 %v308, %v307
    %v318 = vunpack.c.l.b16 %v104
    %v319 = vunpack.c.h.b16 %v104
    %v320 = vunpack.c.l.b16 %v105
    %v321 = vunpack.c.h.b16 %v105
    %v322 = vunpack.c.l.b16 %v106
    %v323 = vunpack.c.h.b16 %v106
    %v324 = vunpack.c.l.b16 %v107
    %v325 = vunpack.c.h.b16 %v107
    %v326 = vunpack.c.l.b16 %v108
    %v327 = vunpack.c.h.b16 %v108
    %v328 = vunpack.c.l.b16 %v109
    %v329 = vunpack.c.h.b16 %v109
    %v330 = vunpack.c.l.b16 %v110
    %v331 = vunpack.c.h.b16 %v110
    %v332 = vunpack.c.l.b16 %v111
    %v333 = vunpack.c.h.b16 %v111
    %v334 = vpack.c.b16 %v322, %v318
    %v335 = vpack.c.b16 %v323, %v319
    %v336 = vpack.c.b16 %v324, %v320
    %v337 = vpack.c.b16 %v325, %v321
    %v338 = vpack.c.b16 %v330, %v326
    %v339 = vpack.c.b16 %v331, %v327
    %v340 = vpack.c.b16 %v332, %v328
    %v341 = vpack.c.b16 %v333, %v329
    %vm350 = vcmask 261120
    %v352 = vsel %vm350, %v309, 0
    %354 = vmatprep.subr.bf16.mxu0 %v335
    %355 = vmatpush1.bf16.msra.mxu0 %v334
    %356 = vmatprep.subr.bf16.mxu0 %v339
    %357 = vmatpush1.bf16.msra.mxu0 %v338
    %358 = vmatprep.subr.bf16.mxu0 0
    %359 = vmatpush1.bf16.msra.mxu0 0
    %360 = vmatprep.subr.bf16.mxu0 0
    %361 = vmatpush1.bf16.msra.mxu0 0
    %362 = vmatprep.subr.bf16.mxu0 0
    %363 = vmatpush1.bf16.msra.mxu0 0
    %364 = vmatprep.subr.bf16.mxu0 0
    %365 = vmatpush1.bf16.msra.mxu0 0
    %366 = vmatprep.subr.bf16.mxu0 0
    %367 = vmatpush1.bf16.msra.mxu0 0
    %368 = vmatprep.subr.bf16.mxu0 0
    %369 = vmatpush1.bf16.msra.mxu0 0
    %370 = vmatprep.subr.bf16.mxu0 0
    %371 = vmatpush1.bf16.msra.mxu0 0
    %372 = vmatprep.subr.bf16.mxu0 0
    %373 = vmatpush1.bf16.msra.mxu0 0
    %374 = vmatprep.subr.bf16.mxu0 0
    %375 = vmatpush1.bf16.msra.mxu0 0
    %376 = vmatprep.subr.bf16.mxu0 0
    %377 = vmatpush1.bf16.msra.mxu0 0
    %378 = vmatprep.subr.bf16.mxu0 0
    %379 = vmatpush1.bf16.msra.mxu0 0
    %380 = vmatprep.subr.bf16.mxu0 0
    %381 = vmatpush1.bf16.msra.mxu0 0
    %382 = vmatprep.subr.bf16.mxu0 0
    %383 = vmatpush1.bf16.msra.mxu0 0
    %384 = vmatprep.subr.bf16.mxu0 0
    %385 = vmatpush1.bf16.msra.mxu0 0
    %386 = vmatprep.mubr.bf16.mxu0 0
    %387 = vmatmul.mubr.bf16.gmra.mrb[0].mxu0 %v352
    %v388 = vpop.f32.mrb[0].mxu0
    %v389 = vadd.f32 %v254, %v388
    %v390 = vpop.f32.mrb[0].mxu0
    %v391 = vadd.f32 %v256, %v390
    %v392 = vpop.f32.mrb[0].mxu0
    %v393 = vadd.f32 %v258, %v392
    %v394 = vpop.f32.mrb[0].mxu0
    %v395 = vadd.f32 %v260, %v394
    %396 = vdwg.mxu0
    %397 = vmatprep.subr.bf16.mxu0 %v337
    %398 = vmatpush1.bf16.msra.mxu0 %v336
    %399 = vmatprep.subr.bf16.mxu0 %v341
    %400 = vmatpush1.bf16.msra.mxu0 %v340
    %401 = vmatprep.subr.bf16.mxu0 0
    %402 = vmatpush1.bf16.msra.mxu0 0
    %403 = vmatprep.subr.bf16.mxu0 0
    %404 = vmatpush1.bf16.msra.mxu0 0
    %405 = vmatprep.subr.bf16.mxu0 0
    %406 = vmatpush1.bf16.msra.mxu0 0
    %407 = vmatprep.subr.bf16.mxu0 0
    %408 = vmatpush1.bf16.msra.mxu0 0
    %409 = vmatprep.subr.bf16.mxu0 0
    %410 = vmatpush1.bf16.msra.mxu0 0
    %411 = vmatprep.subr.bf16.mxu0 0
    %412 = vmatpush1.bf16.msra.mxu0 0
    %413 = vmatprep.subr.bf16.mxu0 0
    %414 = vmatpush1.bf16.msra.mxu0 0
    %415 = vmatprep.subr.bf16.mxu0 0
    %416 = vmatpush1.bf16.msra.mxu0 0
    %417 = vmatprep.subr.bf16.mxu0 0
    %418 = vmatpush1.bf16.msra.mxu0 0
    %419 = vmatprep.subr.bf16.mxu0 0
    %420 = vmatpush1.bf16.msra.mxu0 0
    %421 = vmatprep.subr.bf16.mxu0 0
    %422 = vmatpush1.bf16.msra.mxu0 0
    %423 = vmatprep.subr.bf16.mxu0 0
    %424 = vmatpush1.bf16.msra.mxu0 0
    %425 = vmatprep.subr.bf16.mxu0 0
    %426 = vmatpush1.bf16.msra.mxu0 0
    %427 = vmatprep.subr.bf16.mxu0 0
    %428 = vmatpush1.bf16.msra.mxu0 0
    %429 = vmatprep.mubr.bf16.mxu0 0
    %430 = vmatmul.mubr.bf16.gmra.mrb[0].mxu0 %v352
    %v431 = vpop.f32.mrb[0].mxu0
    %v432 = vadd.f32 %v297, %v431
    %v433 = vpop.f32.mrb[0].mxu0
    %v434 = vadd.f32 %v299, %v433
    %v435 = vpop.f32.mrb[0].mxu0
    %v436 = vadd.f32 %v301, %v435
    %v437 = vpop.f32.mrb[0].mxu0
    %v438 = vadd.f32 %v303, %v437
    %439 = vdwg.mxu0
    %v440 = vld [vmem:[%s4] sm:$0xf]
    %v442 = vlaneseq
    %v443 = vshrl.u32 %v442, 7
    %v444 = vsub.s32 0, %v443
    %v445 = vrot.slane %v440, %v444
    %v446 = vlaneseq
    %v447 = vshrl.u32 %v446, 7
    %v448 = vsub.s32 1, %v447
    %v449 = vrot.slane %v440, %v448
    %v450 = vlaneseq
    %v451 = vshrl.u32 %v450, 7
    %v452 = vsub.s32 2, %v451
    %v453 = vrot.slane %v440, %v452
    %v454 = vlaneseq
    %v455 = vshrl.u32 %v454, 7
    %v456 = vsub.s32 3, %v455
    %v457 = vrot.slane %v440, %v456
    %v462 = vadd.f32 %v389, %v445
    %v463 = vadd.f32 %v391, %v449
    %v464 = vadd.f32 %v432, %v453
    %v465 = vadd.f32 %v434, %v457
    %v466 = vadd.f32 %v393, %v445
    %v467 = vadd.f32 %v395, %v449
    %v468 = vadd.f32 %v436, %v453
    %v469 = vadd.f32 %v438, %v457
    %v470 = vtanh.pop %v462
    %v471 = vtanh.pop %v463
    %v472 = vtanh.pop %v464
    %v473 = vtanh.pop %v465
    %v474 = vtanh.pop %v466
    %v475 = vtanh.pop %v467
    %v476 = vtanh.pop %v468
    %v477 = vtanh.pop %v469
    %v478 = vadd.f32 %v470, %v471
    %v479 = vadd.f32 %v478, %v472
    %v480 = vadd.f32 %v479, %v473
    %481 = vadd.xlane.f32.xlu0 %v480
    %v482 = vpop.xlane.xlu0 %481
    %v483 = vadd.f32 %v474, %v475
    %v484 = vadd.f32 %v483, %v476
    %v485 = vadd.f32 %v484, %v477
    %486 = vadd.xlane.f32.xlu0 %v485
    %v487 = vpop.xlane.xlu0 %486
    %v488 = vrcp.pop 512.0
    %v489 = vmul.f32 %v482, %v488
    %v490 = vmul.f32 %v487, %v488
    %v491 = vmul.f32 %v470, %v470
    %v492 = vmul.f32 %v471, %v471
    %v493 = vmul.f32 %v472, %v472
    %v494 = vmul.f32 %v473, %v473
    %v495 = vmul.f32 %v474, %v474
    %v496 = vmul.f32 %v475, %v475
    %v497 = vmul.f32 %v476, %v476
    %v498 = vmul.f32 %v477, %v477
    %v499 = vadd.f32 %v491, %v492
    %v500 = vadd.f32 %v499, %v493
    %v501 = vadd.f32 %v500, %v494
    %502 = vadd.xlane.f32.xlu0 %v501
    %v503 = vpop.xlane.xlu0 %502
    %v504 = vadd.f32 %v495, %v496
    %v505 = vadd.f32 %v504, %v497
    %v506 = vadd.f32 %v505, %v498
    %507 = vadd.xlane.f32.xlu0 %v506
    %v508 = vpop.xlane.xlu0 %507
    %v509 = vmul.f32 %v503, %v488
    %v510 = vmul.f32 %v508, %v488
    %v511 = vmul.f32 %v489, %v489
    %v512 = vmul.f32 %v490, %v490
    %v513 = vsub.f32 %v509, %v511
    %v514 = vsub.f32 %v510, %v512
    %v515 = vadd.f32 %v513, 1e-05
    %v516 = vadd.f32 %v514, 1e-05
    %v517 = vrsqrt.pop %v515
    %v518 = vrsqrt.pop %v516
    %v519 = vsub.f32 %v470, %v489
    %v520 = vsub.f32 %v471, %v489
    %v521 = vsub.f32 %v472, %v489
    %v522 = vsub.f32 %v473, %v489
    %v523 = vsub.f32 %v474, %v490
    %v524 = vsub.f32 %v475, %v490
    %v525 = vsub.f32 %v476, %v490
    %v526 = vsub.f32 %v477, %v490
    %v527 = vmul.f32 %v519, %v517
    %v528 = vmul.f32 %v520, %v517
    %v529 = vmul.f32 %v521, %v517
    %v530 = vmul.f32 %v522, %v517
    %v531 = vmul.f32 %v523, %v518
    %v532 = vmul.f32 %v524, %v518
    %v533 = vmul.f32 %v525, %v518
    %v534 = vmul.f32 %v526, %v518
    %v535 = vld [vmem:[%s5] sm:$0xf]
    %v537 = vlaneseq
    %v538 = vshrl.u32 %v537, 7
    %v539 = vsub.s32 0, %v538
    %v540 = vrot.slane %v535, %v539
    %v541 = vlaneseq
    %v542 = vshrl.u32 %v541, 7
    %v543 = vsub.s32 1, %v542
    %v544 = vrot.slane %v535, %v543
    %v545 = vlaneseq
    %v546 = vshrl.u32 %v545, 7
    %v547 = vsub.s32 2, %v546
    %v548 = vrot.slane %v535, %v547
    %v549 = vlaneseq
    %v550 = vshrl.u32 %v549, 7
    %v551 = vsub.s32 3, %v550
    %v552 = vrot.slane %v535, %v551
    %v557 = vmul.f32 %v527, %v540
    %v558 = vmul.f32 %v528, %v544
    %v559 = vmul.f32 %v529, %v548
    %v560 = vmul.f32 %v530, %v552
    %v561 = vmul.f32 %v531, %v540
    %v562 = vmul.f32 %v532, %v544
    %v563 = vmul.f32 %v533, %v548
    %v564 = vmul.f32 %v534, %v552
    %v565 = vld [vmem:[%s6] sm:$0xf]
    %v567 = vlaneseq
    %v568 = vshrl.u32 %v567, 7
    %v569 = vsub.s32 0, %v568
    %v570 = vrot.slane %v565, %v569
    %v571 = vlaneseq
    %v572 = vshrl.u32 %v571, 7
    %v573 = vsub.s32 1, %v572
    %v574 = vrot.slane %v565, %v573
    %v575 = vlaneseq
    %v576 = vshrl.u32 %v575, 7
    %v577 = vsub.s32 2, %v576
    %v578 = vrot.slane %v565, %v577
    %v579 = vlaneseq
    %v580 = vshrl.u32 %v579, 7
    %v581 = vsub.s32 3, %v580
    %v582 = vrot.slane %v565, %v581
    %v587 = vadd.f32 %v557, %v570
    %v588 = vadd.f32 %v558, %v574
    %v589 = vadd.f32 %v559, %v578
    %v590 = vadd.f32 %v560, %v582
    %v591 = vadd.f32 %v561, %v570
    %v592 = vadd.f32 %v562, %v574
    %v593 = vadd.f32 %v563, %v578
    %v594 = vadd.f32 %v564, %v582
    %v595 = vpack.c.bf16 %v591, %v587
    %v596 = vpack.c.bf16 %v592, %v588
    %v597 = vpack.c.bf16 %v593, %v589
    %v598 = vpack.c.bf16 %v594, %v590
    %v599 = vld [vmem:[#allocation10] sm:$0xf]
    %v600 = vld [vmem:[#allocation10 + $0x4] sm:$0xf]
    %v601 = vld [vmem:[#allocation10 + $0x8] sm:$0xf]
    %v602 = vld [vmem:[#allocation10 + $0xc] sm:$0xf]
    %v603 = vld [vmem:[#allocation10 + $0x10] sm:$0xf]
    %v604 = vld [vmem:[#allocation10 + $0x14] sm:$0xf]
    %v605 = vld [vmem:[#allocation10 + $0x18] sm:$0xf]
    %v606 = vld [vmem:[#allocation10 + $0x1c] sm:$0xf]
    %v607 = vld [vmem:[#allocation10 + $0x20] sm:$0xf]
    %v608 = vld [vmem:[#allocation10 + $0x24] sm:$0xf]
    %v609 = vld [vmem:[#allocation10 + $0x28] sm:$0xf]
    %v610 = vld [vmem:[#allocation10 + $0x2c] sm:$0xf]
    %v611 = vld [vmem:[#allocation10 + $0x30] sm:$0xf]
    %v612 = vld [vmem:[#allocation10 + $0x34] sm:$0xf]
    %v613 = vld [vmem:[#allocation10 + $0x38] sm:$0xf]
    %v614 = vld [vmem:[#allocation10 + $0x3c] sm:$0xf]
    %v615 = vld [vmem:[#allocation10 + $0x40] sm:$0xf]
    %v616 = vld [vmem:[#allocation10 + $0x44] sm:$0xf]
    %v617 = vld [vmem:[#allocation10 + $0x48] sm:$0xf]
    %v618 = vld [vmem:[#allocation10 + $0x4c] sm:$0xf]
    %v619 = vld [vmem:[#allocation10 + $0x50] sm:$0xf]
    %v620 = vld [vmem:[#allocation10 + $0x54] sm:$0xf]
    %v621 = vld [vmem:[#allocation10 + $0x58] sm:$0xf]
    %v622 = vld [vmem:[#allocation10 + $0x5c] sm:$0xf]
    %v623 = vld [vmem:[#allocation10 + $0x60] sm:$0xf]
    %v624 = vld [vmem:[#allocation10 + $0x64] sm:$0xf]
    %v625 = vld [vmem:[#allocation10 + $0x68] sm:$0xf]
    %v626 = vld [vmem:[#allocation10 + $0x6c] sm:$0xf]
    %v627 = vld [vmem:[#allocation10 + $0x70] sm:$0xf]
    %v628 = vld [vmem:[#allocation10 + $0x74] sm:$0xf]
    %v629 = vld [vmem:[#allocation10 + $0x78] sm:$0xf]
    %v630 = vld [vmem:[#allocation10 + $0x7c] sm:$0xf]
    %v631 = vld [vmem:[#allocation10 + $0x80] sm:$0xf]
    %v632 = vld [vmem:[#allocation10 + $0x84] sm:$0xf]
    %v633 = vld [vmem:[#allocation10 + $0x88] sm:$0xf]
    %v634 = vld [vmem:[#allocation10 + $0x8c] sm:$0xf]
    %v635 = vld [vmem:[#allocation10 + $0x90] sm:$0xf]
    %v636 = vld [vmem:[#allocation10 + $0x94] sm:$0xf]
    %v637 = vld [vmem:[#allocation10 + $0x98] sm:$0xf]
    %v638 = vld [vmem:[#allocation10 + $0x9c] sm:$0xf]
    %v639 = vld [vmem:[#allocation10 + $0xa0] sm:$0xf]
    %v640 = vld [vmem:[#allocation10 + $0xa4] sm:$0xf]
    %v641 = vld [vmem:[#allocation10 + $0xa8] sm:$0xf]
    %v642 = vld [vmem:[#allocation10 + $0xac] sm:$0xf]
    %v643 = vld [vmem:[#allocation10 + $0xb0] sm:$0xf]
    %v644 = vld [vmem:[#allocation10 + $0xb4] sm:$0xf]
    %v645 = vld [vmem:[#allocation10 + $0xb8] sm:$0xf]
    %v646 = vld [vmem:[#allocation10 + $0xbc] sm:$0xf]
    %v647 = vld [vmem:[#allocation10 + $0xc0] sm:$0xf]
    %v648 = vld [vmem:[#allocation10 + $0xc4] sm:$0xf]
    %v649 = vld [vmem:[#allocation10 + $0xc8] sm:$0xf]
    %v650 = vld [vmem:[#allocation10 + $0xcc] sm:$0xf]
    %v651 = vld [vmem:[#allocation10 + $0xd0] sm:$0xf]
    %v652 = vld [vmem:[#allocation10 + $0xd4] sm:$0xf]
    %v653 = vld [vmem:[#allocation10 + $0xd8] sm:$0xf]
    %v654 = vld [vmem:[#allocation10 + $0xdc] sm:$0xf]
    %v655 = vld [vmem:[#allocation10 + $0xe0] sm:$0xf]
    %v656 = vld [vmem:[#allocation10 + $0xe4] sm:$0xf]
    %v657 = vld [vmem:[#allocation10 + $0xe8] sm:$0xf]
    %v658 = vld [vmem:[#allocation10 + $0xec] sm:$0xf]
    %v659 = vld [vmem:[#allocation10 + $0xf0] sm:$0xf]
    %v660 = vld [vmem:[#allocation10 + $0xf4] sm:$0xf]
    %v661 = vld [vmem:[#allocation10 + $0xf8] sm:$0xf]
    %v662 = vld [vmem:[#allocation10 + $0xfc] sm:$0xf]
    %v663 = vld [vmem:[%s8] sm:$0x1]
    %v665 = vlaneseq
    %v666 = vshrl.u32 %v665, 7
    %v667 = vsub.s32 0, %v666
    %v668 = vrot.slane %v663, %v667
    %v734 = vunpack.c.l.b16 %v599
    %v735 = vunpack.c.l.b16 %v600
    %v736 = vunpack.c.l.b16 %v601
    %v737 = vunpack.c.l.b16 %v602
    %v738 = vunpack.c.l.b16 %v603
    %v739 = vunpack.c.l.b16 %v604
    %v740 = vunpack.c.l.b16 %v605
    %v741 = vunpack.c.l.b16 %v606
    %v742 = vunpack.c.l.b16 %v607
    %v743 = vunpack.c.l.b16 %v608
    %v744 = vunpack.c.l.b16 %v609
    %v745 = vunpack.c.l.b16 %v610
    %v746 = vunpack.c.l.b16 %v611
    %v747 = vunpack.c.l.b16 %v612
    %v748 = vunpack.c.l.b16 %v613
    %v749 = vunpack.c.l.b16 %v614
    %v750 = vunpack.c.l.b16 %v615
    %v751 = vunpack.c.l.b16 %v616
    %v752 = vunpack.c.l.b16 %v617
    %v753 = vunpack.c.l.b16 %v618
    %v754 = vunpack.c.l.b16 %v619
    %v755 = vunpack.c.l.b16 %v620
    %v756 = vunpack.c.l.b16 %v621
    %v757 = vunpack.c.l.b16 %v622
    %v758 = vunpack.c.l.b16 %v623
    %v759 = vunpack.c.l.b16 %v624
    %v760 = vunpack.c.l.b16 %v625
    %v761 = vunpack.c.l.b16 %v626
    %v762 = vunpack.c.l.b16 %v627
    %v763 = vunpack.c.l.b16 %v628
    %v764 = vunpack.c.l.b16 %v629
    %v765 = vunpack.c.l.b16 %v630
    %v766 = vunpack.c.l.b16 %v631
    %v767 = vunpack.c.l.b16 %v632
    %v768 = vunpack.c.l.b16 %v633
    %v769 = vunpack.c.l.b16 %v634
    %v770 = vunpack.c.l.b16 %v635
    %v771 = vunpack.c.l.b16 %v636
    %v772 = vunpack.c.l.b16 %v637
    %v773 = vunpack.c.l.b16 %v638
    %v774 = vunpack.c.l.b16 %v639
    %v775 = vunpack.c.l.b16 %v640
    %v776 = vunpack.c.l.b16 %v641
    %v777 = vunpack.c.l.b16 %v642
    %v778 = vunpack.c.l.b16 %v643
    %v779 = vunpack.c.l.b16 %v644
    %v780 = vunpack.c.l.b16 %v645
    %v781 = vunpack.c.l.b16 %v646
    %v782 = vunpack.c.l.b16 %v647
    %v783 = vunpack.c.l.b16 %v648
    %v784 = vunpack.c.l.b16 %v649
    %v785 = vunpack.c.l.b16 %v650
    %v786 = vunpack.c.l.b16 %v651
    %v787 = vunpack.c.l.b16 %v652
    %v788 = vunpack.c.l.b16 %v653
    %v789 = vunpack.c.l.b16 %v654
    %v790 = vunpack.c.l.b16 %v655
    %v791 = vunpack.c.l.b16 %v656
    %v792 = vunpack.c.l.b16 %v657
    %v793 = vunpack.c.l.b16 %v658
    %v794 = vunpack.c.l.b16 %v659
    %v795 = vunpack.c.l.b16 %v660
    %v796 = vunpack.c.l.b16 %v661
    %v797 = vunpack.c.l.b16 %v662
    %v798 = vpack.c.b16 %v735, %v734
    %v799 = vpack.c.b16 %v737, %v736
    %v800 = vpack.c.b16 %v739, %v738
    %v801 = vpack.c.b16 %v741, %v740
    %v802 = vpack.c.b16 %v743, %v742
    %v803 = vpack.c.b16 %v745, %v744
    %v804 = vpack.c.b16 %v747, %v746
    %v805 = vpack.c.b16 %v749, %v748
    %v806 = vpack.c.b16 %v751, %v750
    %v807 = vpack.c.b16 %v753, %v752
    %v808 = vpack.c.b16 %v755, %v754
    %v809 = vpack.c.b16 %v757, %v756
    %v810 = vpack.c.b16 %v759, %v758
    %v811 = vpack.c.b16 %v761, %v760
    %v812 = vpack.c.b16 %v763, %v762
    %v813 = vpack.c.b16 %v765, %v764
    %v814 = vpack.c.b16 %v767, %v766
    %v815 = vpack.c.b16 %v769, %v768
    %v816 = vpack.c.b16 %v771, %v770
    %v817 = vpack.c.b16 %v773, %v772
    %v818 = vpack.c.b16 %v775, %v774
    %v819 = vpack.c.b16 %v777, %v776
    %v820 = vpack.c.b16 %v779, %v778
    %v821 = vpack.c.b16 %v781, %v780
    %v822 = vpack.c.b16 %v783, %v782
    %v823 = vpack.c.b16 %v785, %v784
    %v824 = vpack.c.b16 %v787, %v786
    %v825 = vpack.c.b16 %v789, %v788
    %v826 = vpack.c.b16 %v791, %v790
    %v827 = vpack.c.b16 %v793, %v792
    %v828 = vpack.c.b16 %v795, %v794
    %v829 = vpack.c.b16 %v797, %v796
    %862 = vmatprep.subr.bf16.mxu0 0
    %863 = vmatpush1.bf16.msra.mxu0 %v798
    %864 = vmatprep.subr.bf16.mxu0 0
    %865 = vmatpush1.bf16.msra.mxu0 %v799
    %866 = vmatprep.subr.bf16.mxu0 0
    %867 = vmatpush1.bf16.msra.mxu0 %v800
    %868 = vmatprep.subr.bf16.mxu0 0
    %869 = vmatpush1.bf16.msra.mxu0 %v801
    %870 = vmatprep.subr.bf16.mxu0 0
    %871 = vmatpush1.bf16.msra.mxu0 %v802
    %872 = vmatprep.subr.bf16.mxu0 0
    %873 = vmatpush1.bf16.msra.mxu0 %v803
    %874 = vmatprep.subr.bf16.mxu0 0
    %875 = vmatpush1.bf16.msra.mxu0 %v804
    %876 = vmatprep.subr.bf16.mxu0 0
    %877 = vmatpush1.bf16.msra.mxu0 %v805
    %878 = vmatprep.subr.bf16.mxu0 0
    %879 = vmatpush1.bf16.msra.mxu0 %v806
    %880 = vmatprep.subr.bf16.mxu0 0
    %881 = vmatpush1.bf16.msra.mxu0 %v807
    %882 = vmatprep.subr.bf16.mxu0 0
    %883 = vmatpush1.bf16.msra.mxu0 %v808
    %884 = vmatprep.subr.bf16.mxu0 0
    %885 = vmatpush1.bf16.msra.mxu0 %v809
    %886 = vmatprep.subr.bf16.mxu0 0
    %887 = vmatpush1.bf16.msra.mxu0 %v810
    %888 = vmatprep.subr.bf16.mxu0 0
    %889 = vmatpush1.bf16.msra.mxu0 %v811
    %890 = vmatprep.subr.bf16.mxu0 0
    %891 = vmatpush1.bf16.msra.mxu0 %v812
    %892 = vmatprep.subr.bf16.mxu0 0
    %893 = vmatpush1.bf16.msra.mxu0 %v813
    %894 = vmatprep.mubr.bf16.mxu0 %v596
    %895 = vmatmul.mubr.bf16.gmra.mrb[0].mxu0 %v595
    %v896 = vpop.f32.mrb[0].mxu0
    %v897 = vadd.f32 %v668, %v896
    %v898 = vpop.f32.mrb[0].mxu0
    %v899 = vpop.f32.mrb[0].mxu0
    %v900 = vadd.f32 %v668, %v899
    %v901 = vpop.f32.mrb[0].mxu0
    %902 = vdwg.mxu0
    %903 = vmatprep.subr.bf16.mxu0 0
    %904 = vmatpush1.bf16.msra.mxu0 %v814
    %905 = vmatprep.subr.bf16.mxu0 0
    %906 = vmatpush1.bf16.msra.mxu0 %v815
    %907 = vmatprep.subr.bf16.mxu0 0
    %908 = vmatpush1.bf16.msra.mxu0 %v816
    %909 = vmatprep.subr.bf16.mxu0 0
    %910 = vmatpush1.bf16.msra.mxu0 %v817
    %911 = vmatprep.subr.bf16.mxu0 0
    %912 = vmatpush1.bf16.msra.mxu0 %v818
    %913 = vmatprep.subr.bf16.mxu0 0
    %914 = vmatpush1.bf16.msra.mxu0 %v819
    %915 = vmatprep.subr.bf16.mxu0 0
    %916 = vmatpush1.bf16.msra.mxu0 %v820
    %917 = vmatprep.subr.bf16.mxu0 0
    %918 = vmatpush1.bf16.msra.mxu0 %v821
    %919 = vmatprep.subr.bf16.mxu0 0
    %920 = vmatpush1.bf16.msra.mxu0 %v822
    %921 = vmatprep.subr.bf16.mxu0 0
    %922 = vmatpush1.bf16.msra.mxu0 %v823
    %923 = vmatprep.subr.bf16.mxu0 0
    %924 = vmatpush1.bf16.msra.mxu0 %v824
    %925 = vmatprep.subr.bf16.mxu0 0
    %926 = vmatpush1.bf16.msra.mxu0 %v825
    %927 = vmatprep.subr.bf16.mxu0 0
    %928 = vmatpush1.bf16.msra.mxu0 %v826
    %929 = vmatprep.subr.bf16.mxu0 0
    %930 = vmatpush1.bf16.msra.mxu0 %v827
    %931 = vmatprep.subr.bf16.mxu0 0
    %932 = vmatpush1.bf16.msra.mxu0 %v828
    %933 = vmatprep.subr.bf16.mxu0 0
    %934 = vmatpush1.bf16.msra.mxu0 %v829
    %935 = vmatprep.mubr.bf16.mxu0 %v598
    %936 = vmatmul.mubr.bf16.gmra.mrb[0].mxu0 %v597
    %v937 = vpop.f32.mrb[0].mxu0
    %v938 = vadd.f32 %v897, %v937
    %v939 = vpop.f32.mrb[0].mxu0
    %v940 = vpop.f32.mrb[0].mxu0
    %v941 = vadd.f32 %v900, %v940
    %v942 = vpop.f32.mrb[0].mxu0
    %943 = vdwg.mxu0
    %944 = vst [vmem:[#allocation11] sm:$0xff] %v938
    %945 = vst [vmem:[#allocation11 + $0x8] sm:$0xff] %v941
    // Predicated region
    $region58: #{tpu_custom_call.1} parent=1 // pred_check
      _
    $region59: #{tpu_custom_call.1} parent=1 // pred_check_branch
      %947 = sbr.rel (0) target = $region61
    $region60: #{tpu_custom_call.1} parent=1 // pred_region
      %s949 = ssub.s32 256, 256
      %950 = vsyncadd [#allocation4], %s949
      %s951 = sshll.u32 [#allocation11], 4
      %s952 = int_to_ptr.vmem [resolvable:$true] %s951
      %957 = dma.vmem_to_hbm [thread:$0]  %s952, 256, %s9, [#allocation4], 128, 128, 8
    $region61: #{tpu_custom_call.1} parent=1 // pred_fallthru
      _
    // Predicated region
    $region62: #{tpu_custom_call.1} parent=1 // pred_check
      _
    $region63: #{tpu_custom_call.1} parent=1 // pred_check_branch
      %959 = sbr.rel (0) target = $region65
    $region64: #{tpu_custom_call.1} parent=1 // pred_region
      %960 = dma.done [#allocation4], 256
    $region65: #{tpu_custom_call.1} parent=1 // pred_fallthru
      _
    %961 = vsyncpa [#allocation3], 1
    %962 = vsyncpa [#allocation6], 1
    %963 = vsyncpa [#allocation9], 1
    %964 = vsyncpa [#allocation4], 1

// kernel: tpu_custom_call.1
$region0: #{tpu_custom_call.1}
  #allocation0 [shape = 'u32[]', space=smem, size = 0x4, offset = 0x4, fixed_abs, tag = 'smem constant byte address 0x4 - core index']
  #allocation1 [shape = 'u32[144,128]{1,0:T(1,128)}', space=vmem, size = 0x12000, scoped, tag = 'internal scratch']
  %s0 = inlined_call_operand.hbm [shape: bf16[16,32], index: 0, kind: input, shape index: {}]
  %s1 = inlined_call_operand.hbm [shape: bf16[16,64], index: 1, kind: input, shape index: {}]
  %s2 = inlined_call_operand.hbm [shape: bf16[32,512], index: 2, kind: input, shape index: {}]
  %s3 = inlined_call_operand.hbm [shape: bf16[64,512], index: 3, kind: input, shape index: {}]
  %s4 = inlined_call_operand.vmem [shape: f32[1,512], index: 4, kind: input, shape index: {}]
  %s5 = inlined_call_operand.vmem [shape: f32[1,512], index: 5, kind: input, shape index: {}]
  %s6 = inlined_call_operand.vmem [shape: f32[1,512], index: 6, kind: input, shape index: {}]
  %s7 = inlined_call_operand.hbm [shape: bf16[512,128], index: 7, kind: input, shape index: {}]
  %s8 = inlined_call_operand.vmem [shape: f32[1,128], index: 8, kind: input, shape index: {}]
  %s9 = inlined_call_operand.hbm [shape: f32[16,128], index: 9, kind: output, shape index: {}]
  %s10 = sld [smem:[#allocation0]]
  $region66: #{tpu_custom_call.1} parent=0
    _
  %s12 = ssub.s32 1, %s10
  %s13 = scalar_select 0, %s12, %s10
  $region1: #{tpu_custom_call.1} parent=0
    #allocation2 [shape = 'u8[4096]{0}', space=vmem, size = 0x1000, scoped, tag = 'input window, operand 0, single buffered']
    #allocation3 [shape = 's32[1]{0}', space=sflag, size = 0x4, scoped, tag = 'scoped memory for tpu_custom_call.1']
    #allocation4 [shape = 's32[1]{0}', space=sflag, size = 0x4, scoped, tag = 'scoped memory for tpu_custom_call.1']
    #allocation5 [shape = 'u8[4096]{0}', space=vmem, size = 0x1000, scoped, tag = 'input window, operand 1, single buffered']
    #allocation6 [shape = 's32[1]{0}', space=sflag, size = 0x4, scoped, tag = 'scoped memory for tpu_custom_call.1']
    #allocation7 [shape = 'u8[32768]{0}', space=vmem, size = 0x8000, scoped, tag = 'input window, operand 2, single buffered']
    #allocation8 [shape = 'u8[65536]{0}', space=vmem, size = 0x10000, scoped, tag = 'input window, operand 3, single buffered']
    #allocation9 [shape = 's32[1]{0}', space=sflag, size = 0x4, scoped, tag = 'scoped memory for tpu_custom_call.1']
    #allocation10 [shape = 'u8[131072]{0}', space=vmem, size = 0x20000, scoped, tag = 'input window, operand 7, single buffered']
    #allocation11 [shape = 'u8[8192]{0}', space=vmem, size = 0x2000, scoped, tag = 'output window, operand 0, single buffered']
    %14 = vsyncpa [#allocation3], 0
    %15 = vsyncpa [#allocation6], 0
    %16 = vsyncpa [#allocation9], 0
    %17 = vsyncpa [#allocation4], 0
    // Predicated region
    $region2: #{tpu_custom_call.1} parent=1 // pred_check
      _
    $region3: #{tpu_custom_call.1} parent=1 // pred_check_branch
      %19 = sbr.rel (0) target = $region5
    $region4: #{tpu_custom_call.1} parent=1 // pred_region
      %s21 = ssub.s32 128, 128
      %22 = vsyncadd [#allocation3], %s21
      %s23 = sshll.u32 [#allocation2], 4
      %s24 = int_to_ptr.vmem [resolvable:$true] %s23
      %29 = dma.hbm_to_vmem [thread:$0]  %s0, 128, %s24, [#allocation3], 64, 64, 4
    $region5: #{tpu_custom_call.1} parent=1 // pred_fallthru
      _
    // Predicated region
    $region6: #{tpu_custom_call.1} parent=1 // pred_check
      _
    $region7: #{tpu_custom_call.1} parent=1 // pred_check_branch
      %31 = sbr.rel (0) target = $region9
    $region8: #{tpu_custom_call.1} parent=1 // pred_region
      %s33 = ssub.s32 128, 128
      %34 = vsyncadd [#allocation6], %s33
      %s35 = sshll.u32 [#allocation5], 4
      %s36 = int_to_ptr.vmem [resolvable:$true] %s35
      %41 = dma.hbm_to_vmem [thread:$0]  %s1, 128, %s36, [#allocation6], 64, 64, 4
    $region9: #{tpu_custom_call.1} parent=1 // pred_fallthru
      _
    // Predicated region
    $region10: #{tpu_custom_call.1} parent=1 // pred_check
      _
    $region11: #{tpu_custom_call.1} parent=1 // pred_check_branch
      %43 = sbr.rel (0) target = $region13
    $region12: #{tpu_custom_call.1} parent=1 // pred_region
      %s45 = ssub.s32 1024, 1024
      %46 = vsyncadd [#allocation6], %s45
      %s47 = sshll.u32 [#allocation7], 4
      %s48 = int_to_ptr.vmem [resolvable:$true] %s47
      %53 = dma.hbm_to_vmem [thread:$0]  %s2, 1024, %s48, [#allocation6], 256, 256, 16
    $region13: #{tpu_custom_call.1} parent=1 // pred_fallthru
      _
    // Predicated region
    $region14: #{tpu_custom_call.1} parent=1 // pred_check
      _
    $region15: #{tpu_custom_call.1} parent=1 // pred_check_branch
      %55 = sbr.rel (0) target = $region17
    $region16: #{tpu_custom_call.1} parent=1 // pred_region
      %s57 = ssub.s32 2048, 2048
      %58 = vsyncadd [#allocation9], %s57
      %s59 = sshll.u32 [#allocation8], 4
      %s60 = int_to_ptr.vmem [resolvable:$true] %s59
      %65 = dma.hbm_to_vmem [thread:$0]  %s3, 2048, %s60, [#allocation9], 256, 256, 16
    $region17: #{tpu_custom_call.1} parent=1 // pred_fallthru
      _
    // Predicated region
    $region18: #{tpu_custom_call.1} parent=1 // pred_check
      _
    $region19: #{tpu_custom_call.1} parent=1 // pred_check_branch
      %67 = sbr.rel (0) target = $region21
    $region20: #{tpu_custom_call.1} parent=1 // pred_region
      _
    $region21: #{tpu_custom_call.1} parent=1 // pred_fallthru
      _
    // Predicated region
    $region22: #{tpu_custom_call.1} parent=1 // pred_check
      _
    $region23: #{tpu_custom_call.1} parent=1 // pred_check_branch
      %69 = sbr.rel (0) target = $region25
    $region24: #{tpu_custom_call.1} parent=1 // pred_region
      _
    $region25: #{tpu_custom_call.1} parent=1 // pred_fallthru
      _
    // Predicated region
    $region26: #{tpu_custom_call.1} parent=1 // pred_check
      _
    $region27: #{tpu_custom_call.1} parent=1 // pred_check_branch
      %71 = sbr.rel (0) target = $region29
    $region28: #{tpu_custom_call.1} parent=1 // pred_region
      _
    $region29: #{tpu_custom_call.1} parent=1 // pred_fallthru
      _
    // Predicated region
    $region30: #{tpu_custom_call.1} parent=1 // pred_check
      _
    $region31: #{tpu_custom_call.1} parent=1 // pred_check_branch
      %73 = sbr.rel (0) target = $region33
    $region32: #{tpu_custom_call.1} parent=1 // pred_region
      %s75 = ssub.s32 4096, 4096
      %76 = vsyncadd [#allocation9], %s75
      %s77 = sshll.u32 [#allocation10], 4
      %s78 = int_to_ptr.vmem [resolvable:$true] %s77
      %83 = dma.hbm_to_vmem [thread:$0]  %s7, 4096, %s78, [#allocation9], 64, 64, 4
    $region33: #{tpu_custom_call.1} parent=1 // pred_fallthru
      _
    // Predicated region
    $region34: #{tpu_custom_call.1} parent=1 // pred_check
      _
    $region35: #{tpu_custom_call.1} parent=1 // pred_check_branch
      %85 = sbr.rel (0) target = $region37
    $region36: #{tpu_custom_call.1} parent=1 // pred_region
      _
    $region37: #{tpu_custom_call.1} parent=1 // pred_fallthru
      _
    // Predicated region
    $region38: #{tpu_custom_call.1} parent=1 // pred_check
      _
    $region39: #{tpu_custom_call.1} parent=1 // pred_check_branch
      %87 = sbr.rel (0) target = $region41
    $region40: #{tpu_custom_call.1} parent=1 // pred_region
      %88 = dma.done [#allocation3], 128
    $region41: #{tpu_custom_call.1} parent=1 // pred_fallthru
      _
    // Predicated region
    $region42: #{tpu_custom_call.1} parent=1 // pred_check
      _
    $region43: #{tpu_custom_call.1} parent=1 // pred_check_branch
      %90 = sbr.rel (0) target = $region45
    $region44: #{tpu_custom_call.1} parent=1 // pred_region
      %91 = dma.done [#allocation6], 128
    $region45: #{tpu_custom_call.1} parent=1 // pred_fallthru
      _
    // Predicated region
    $region46: #{tpu_custom_call.1} parent=1 // pred_check
      _
    $region47: #{tpu_custom_call.1} parent=1 // pred_check_branch
      %93 = sbr.rel (0) target = $region49
    $region48: #{tpu_custom_call.1} parent=1 // pred_region
      %94 = dma.done [#allocation6], 1024
    $region49: #{tpu_custom_call.1} parent=1 // pred_fallthru
      _
    // Predicated region
    $region50: #{tpu_custom_call.1} parent=1 // pred_check
      _
    $region51: #{tpu_custom_call.1} parent=1 // pred_check_branch
      %96 = sbr.rel (0) target = $region53
    $region52: #{tpu_custom_call.1} parent=1 // pred_region
      %97 = dma.done [#allocation9], 2048
    $region53: #{tpu_custom_call.1} parent=1 // pred_fallthru
      _
    // Predicated region
    $region54: #{tpu_custom_call.1} parent=1 // pred_check
      _
    $region55: #{tpu_custom_call.1} parent=1 // pred_check_branch
      %99 = sbr.rel (0) target = $region57
    $region56: #{tpu_custom_call.1} parent=1 // pred_region
      %100 = dma.done [#allocation9], 4096
    $region57: #{tpu_custom_call.1} parent=1 // pred_fallthru
      _
    %v102 = vld [vmem:[#allocation2] sm:$0xf]
    %v103 = vld [vmem:[#allocation2 + $0x4] sm:$0xf]
    %v104 = vld [vmem:[#allocation7] sm:$0xff]
    %v105 = vld [vmem:[#allocation7 + $0x8] sm:$0xff]
    %v106 = vld [vmem:[#allocation7 + $0x10] sm:$0xff]
    %v107 = vld [vmem:[#allocation7 + $0x18] sm:$0xff]
    %v108 = vld [vmem:[#allocation7 + $0x20] sm:$0xff]
    %v109 = vld [vmem:[#allocation7 + $0x28] sm:$0xff]
    %v110 = vld [vmem:[#allocation7 + $0x30] sm:$0xff]
    %v111 = vld [vmem:[#allocation7 + $0x38] sm:$0xff]
    %v112 = vld [vmem:[#allocation5] sm:$0xf]
    %v113 = vld [vmem:[#allocation5 + $0x4] sm:$0xf]
    %v114 = vld [vmem:[#allocation8] sm:$0xff]
    %v115 = vld [vmem:[#allocation8 + $0x8] sm:$0xff]
    %v116 = vld [vmem:[#allocation8 + $0x10] sm:$0xff]
    %v117 = vld [vmem:[#allocation8 + $0x18] sm:$0xff]
    %v118 = vld [vmem:[#allocation8 + $0x20] sm:$0xff]
    %v119 = vld [vmem:[#allocation8 + $0x28] sm:$0xff]
    %v120 = vld [vmem:[#allocation8 + $0x30] sm:$0xff]
    %v121 = vld [vmem:[#allocation8 + $0x38] sm:$0xff]
    %v122 = vld [vmem:[#allocation8 + $0x40] sm:$0xff]
    %v123 = vld [vmem:[#allocation8 + $0x48] sm:$0xff]
    %v124 = vld [vmem:[#allocation8 + $0x50] sm:$0xff]
    %v125 = vld [vmem:[#allocation8 + $0x58] sm:$0xff]
    %v126 = vld [vmem:[#allocation8 + $0x60] sm:$0xff]
    %v127 = vld [vmem:[#allocation8 + $0x68] sm:$0xff]
    %v128 = vld [vmem:[#allocation8 + $0x70] sm:$0xff]
    %v129 = vld [vmem:[#allocation8 + $0x78] sm:$0xff]
    %v132 = vunpack.c.l.b16 %v112
    %v133 = vunpack.c.l.b16 %v113
    %v134 = vpack.c.b16 %v133, %v132
    %v151 = vunpack.c.l.b16 %v114
    %v152 = vunpack.c.h.b16 %v114
    %v153 = vunpack.c.l.b16 %v115
    %v154 = vunpack.c.h.b16 %v115
    %v155 = vunpack.c.l.b16 %v116
    %v156 = vunpack.c.h.b16 %v116
    %v157 = vunpack.c.l.b16 %v117
    %v158 = vunpack.c.h.b16 %v117
    %v159 = vunpack.c.l.b16 %v118
    %v160 = vunpack.c.h.b16 %v118
    %v161 = vunpack.c.l.b16 %v119
    %v162 = vunpack.c.h.b16 %v119
    %v163 = vunpack.c.l.b16 %v120
    %v164 = vunpack.c.h.b16 %v120
    %v165 = vunpack.c.l.b16 %v121
    %v166 = vunpack.c.h.b16 %v121
    %v167 = vunpack.c.l.b16 %v122
    %v168 = vunpack.c.h.b16 %v122
    %v169 = vunpack.c.l.b16 %v123
    %v170 = vunpack.c.h.b16 %v123
    %v171 = vunpack.c.l.b16 %v124
    %v172 = vunpack.c.h.b16 %v124
    %v173 = vunpack.c.l.b16 %v125
    %v174 = vunpack.c.h.b16 %v125
    %v175 = vunpack.c.l.b16 %v126
    %v176 = vunpack.c.h.b16 %v126
    %v177 = vunpack.c.l.b16 %v127
    %v178 = vunpack.c.h.b16 %v127
    %v179 = vunpack.c.l.b16 %v128
    %v180 = vunpack.c.h.b16 %v128
    %v181 = vunpack.c.l.b16 %v129
    %v182 = vunpack.c.h.b16 %v129
    %v183 = vpack.c.b16 %v155, %v151
    %v184 = vpack.c.b16 %v156, %v152
    %v185 = vpack.c.b16 %v157, %v153
    %v186 = vpack.c.b16 %v158, %v154
    %v187 = vpack.c.b16 %v163, %v159
    %v188 = vpack.c.b16 %v164, %v160
    %v189 = vpack.c.b16 %v165, %v161
    %v190 = vpack.c.b16 %v166, %v162
    %v191 = vpack.c.b16 %v171, %v167
    %v192 = vpack.c.b16 %v172, %v168
    %v193 = vpack.c.b16 %v173, %v169
    %v194 = vpack.c.b16 %v174, %v170
    %v195 = vpack.c.b16 %v179, %v175
    %v196 = vpack.c.b16 %v180, %v176
    %v197 = vpack.c.b16 %v181, %v177
    %v198 = vpack.c.b16 %v182, %v178
    %vm215 = vcmask 523264
    %v217 = vsel %vm215, %v134, 0
    %219 = vmatprep.subr.bf16.mxu0 %v184
    %220 = vmatpush1.bf16.msra.mxu0 %v183
    %221 = vmatprep.subr.bf16.mxu0 %v188
    %222 = vmatpush1.bf16.msra.mxu0 %v187
    %223 = vmatprep.subr.bf16.mxu0 %v192
    %224 = vmatpush1.bf16.msra.mxu0 %v191
    %225 = vmatprep.subr.bf16.mxu0 %v196
    %226 = vmatpush1.bf16.msra.mxu0 %v195
    %227 = vmatprep.subr.bf16.mxu0 0
    %228 = vmatpush1.bf16.msra.mxu0 0
    %229 = vmatprep.subr.bf16.mxu0 0
    %230 = vmatpush1.bf16.msra.mxu0 0
    %231 = vmatprep.subr.bf16.mxu0 0
    %232 = vmatpush1.bf16.msra.mxu0 0
    %233 = vmatprep.subr.bf16.mxu0 0
    %234 = vmatpush1.bf16.msra.mxu0 0
    %235 = vmatprep.subr.bf16.mxu0 0
    %236 = vmatpush1.bf16.msra.mxu0 0
    %237 = vmatprep.subr.bf16.mxu0 0
    %238 = vmatpush1.bf16.msra.mxu0 0
    %239 = vmatprep.subr.bf16.mxu0 0
    %240 = vmatpush1.bf16.msra.mxu0 0
    %241 = vmatprep.subr.bf16.mxu0 0
    %242 = vmatpush1.bf16.msra.mxu0 0
    %243 = vmatprep.subr.bf16.mxu0 0
    %244 = vmatpush1.bf16.msra.mxu0 0
    %245 = vmatprep.subr.bf16.mxu0 0
    %246 = vmatpush1.bf16.msra.mxu0 0
    %247 = vmatprep.subr.bf16.mxu0 0
    %248 = vmatpush1.bf16.msra.mxu0 0
    %249 = vmatprep.subr.bf16.mxu0 0
    %250 = vmatpush1.bf16.msra.mxu0 0
    %251 = vmatprep.mubr.bf16.mxu0 0
    %252 = vmatmul.mubr.bf16.gmra.mrb[0].mxu0 %v217
    %v253 = vpop.f32.mrb[0].mxu0
    %v254 = vadd.f32 0.0, %v253
    %v255 = vpop.f32.mrb[0].mxu0
    %v256 = vadd.f32 0.0, %v255
    %v257 = vpop.f32.mrb[0].mxu0
    %v258 = vadd.f32 0.0, %v257
    %v259 = vpop.f32.mrb[0].mxu0
    %v260 = vadd.f32 0.0, %v259
    %261 = vdwg.mxu0
    %262 = vmatprep.subr.bf16.mxu0 %v186
    %263 = vmatpush1.bf16.msra.mxu0 %v185
    %264 = vmatprep.subr.bf16.mxu0 %v190
    %265 = vmatpush1.bf16.msra.mxu0 %v189
    %266 = vmatprep.subr.bf16.mxu0 %v194
    %267 = vmatpush1.bf16.msra.mxu0 %v193
    %268 = vmatprep.subr.bf16.mxu0 %v198
    %269 = vmatpush1.bf16.msra.mxu0 %v197
    %270 = vmatprep.subr.bf16.mxu0 0
    %271 = vmatpush1.bf16.msra.mxu0 0
    %272 = vmatprep.subr.bf16.mxu0 0
    %273 = vmatpush1.bf16.msra.mxu0 0
    %274 = vmatprep.subr.bf16.mxu0 0
    %275 = vmatpush1.bf16.msra.mxu0 0
    %276 = vmatprep.subr.bf16.mxu0 0
    %277 = vmatpush1.bf16.msra.mxu0 0
    %278 = vmatprep.subr.bf16.mxu0 0
    %279 = vmatpush1.bf16.msra.mxu0 0
    %280 = vmatprep.subr.bf16.mxu0 0
    %281 = vmatpush1.bf16.msra.mxu0 0
    %282 = vmatprep.subr.bf16.mxu0 0
    %283 = vmatpush1.bf16.msra.mxu0 0
    %284 = vmatprep.subr.bf16.mxu0 0
    %285 = vmatpush1.bf16.msra.mxu0 0
    %286 = vmatprep.subr.bf16.mxu0 0
    %287 = vmatpush1.bf16.msra.mxu0 0
    %288 = vmatprep.subr.bf16.mxu0 0
    %289 = vmatpush1.bf16.msra.mxu0 0
    %290 = vmatprep.subr.bf16.mxu0 0
    %291 = vmatpush1.bf16.msra.mxu0 0
    %292 = vmatprep.subr.bf16.mxu0 0
    %293 = vmatpush1.bf16.msra.mxu0 0
    %294 = vmatprep.mubr.bf16.mxu0 0
    %295 = vmatmul.mubr.bf16.gmra.mrb[0].mxu0 %v217
    %v296 = vpop.f32.mrb[0].mxu0
    %v297 = vadd.f32 0.0, %v296
    %v298 = vpop.f32.mrb[0].mxu0
    %v299 = vadd.f32 0.0, %v298
    %v300 = vpop.f32.mrb[0].mxu0
    %v301 = vadd.f32 0.0, %v300
    %v302 = vpop.f32.mrb[0].mxu0
    %v303 = vadd.f32 0.0, %v302
    %304 = vdwg.mxu0
    %v307 = vunpack.c.l.b16 %v102
    %v308 = vunpack.c.l.b16 %v103
    %v309 = vpack.c.b16 %v308, %v307
    %v318 = vunpack.c.l.b16 %v104
    %v319 = vunpack.c.h.b16 %v104
    %v320 = vunpack.c.l.b16 %v105
    %v321 = vunpack.c.h.b16 %v105
    %v322 = vunpack.c.l.b16 %v106
    %v323 = vunpack.c.h.b16 %v106
    %v324 = vunpack.c.l.b16 %v107
    %v325 = vunpack.c.h.b16 %v107
    %v326 = vunpack.c.l.b16 %v108
    %v327 = vunpack.c.h.b16 %v108
    %v328 = vunpack.c.l.b16 %v109
    %v329 = vunpack.c.h.b16 %v109
    %v330 = vunpack.c.l.b16 %v110
    %v331 = vunpack.c.h.b16 %v110
    %v332 = vunpack.c.l.b16 %v111
    %v333 = vunpack.c.h.b16 %v111
    %v334 = vpack.c.b16 %v322, %v318
    %v335 = vpack.c.b16 %v323, %v319
    %v336 = vpack.c.b16 %v324, %v320
    %v337 = vpack.c.b16 %v325, %v321
    %v338 = vpack.c.b16 %v330, %v326
    %v339 = vpack.c.b16 %v331, %v327
    %v340 = vpack.c.b16 %v332, %v328
    %v341 = vpack.c.b16 %v333, %v329
    %vm350 = vcmask 261120
    %v352 = vsel %vm350, %v309, 0
    %354 = vmatprep.subr.bf16.mxu0 %v335
    %355 = vmatpush1.bf16.msra.mxu0 %v334
    %356 = vmatprep.subr.bf16.mxu0 %v339
    %357 = vmatpush1.bf16.msra.mxu0 %v338
    %358 = vmatprep.subr.bf16.mxu0 0
    %359 = vmatpush1.bf16.msra.mxu0 0
    %360 = vmatprep.subr.bf16.mxu0 0
    %361 = vmatpush1.bf16.msra.mxu0 0
    %362 = vmatprep.subr.bf16.mxu0 0
    %363 = vmatpush1.bf16.msra.mxu0 0
    %364 = vmatprep.subr.bf16.mxu0 0
    %365 = vmatpush1.bf16.msra.mxu0 0
    %366 = vmatprep.subr.bf16.mxu0 0
    %367 = vmatpush1.bf16.msra.mxu0 0
    %368 = vmatprep.subr.bf16.mxu0 0
    %369 = vmatpush1.bf16.msra.mxu0 0
    %370 = vmatprep.subr.bf16.mxu0 0
    %371 = vmatpush1.bf16.msra.mxu0 0
    %372 = vmatprep.subr.bf16.mxu0 0
    %373 = vmatpush1.bf16.msra.mxu0 0
    %374 = vmatprep.subr.bf16.mxu0 0
    %375 = vmatpush1.bf16.msra.mxu0 0
    %376 = vmatprep.subr.bf16.mxu0 0
    %377 = vmatpush1.bf16.msra.mxu0 0
    %378 = vmatprep.subr.bf16.mxu0 0
    %379 = vmatpush1.bf16.msra.mxu0 0
    %380 = vmatprep.subr.bf16.mxu0 0
    %381 = vmatpush1.bf16.msra.mxu0 0
    %382 = vmatprep.subr.bf16.mxu0 0
    %383 = vmatpush1.bf16.msra.mxu0 0
    %384 = vmatprep.subr.bf16.mxu0 0
    %385 = vmatpush1.bf16.msra.mxu0 0
    %386 = vmatprep.mubr.bf16.mxu0 0
    %387 = vmatmul.mubr.bf16.gmra.mrb[0].mxu0 %v352
    %v388 = vpop.f32.mrb[0].mxu0
    %v389 = vadd.f32 %v254, %v388
    %v390 = vpop.f32.mrb[0].mxu0
    %v391 = vadd.f32 %v256, %v390
    %v392 = vpop.f32.mrb[0].mxu0
    %v393 = vadd.f32 %v258, %v392
    %v394 = vpop.f32.mrb[0].mxu0
    %v395 = vadd.f32 %v260, %v394
    %396 = vdwg.mxu0
    %397 = vmatprep.subr.bf16.mxu0 %v337
    %398 = vmatpush1.bf16.msra.mxu0 %v336
    %399 = vmatprep.subr.bf16.mxu0 %v341
    %400 = vmatpush1.bf16.msra.mxu0 %v340
    %401 = vmatprep.subr.bf16.mxu0 0
    %402 = vmatpush1.bf16.msra.mxu0 0
    %403 = vmatprep.subr.bf16.mxu0 0
    %404 = vmatpush1.bf16.msra.mxu0 0
    %405 = vmatprep.subr.bf16.mxu0 0
    %406 = vmatpush1.bf16.msra.mxu0 0
    %407 = vmatprep.subr.bf16.mxu0 0
    %408 = vmatpush1.bf16.msra.mxu0 0
    %409 = vmatprep.subr.bf16.mxu0 0
    %410 = vmatpush1.bf16.msra.mxu0 0
    %411 = vmatprep.subr.bf16.mxu0 0
    %412 = vmatpush1.bf16.msra.mxu0 0
    %413 = vmatprep.subr.bf16.mxu0 0
    %414 = vmatpush1.bf16.msra.mxu0 0
    %415 = vmatprep.subr.bf16.mxu0 0
    %416 = vmatpush1.bf16.msra.mxu0 0
    %417 = vmatprep.subr.bf16.mxu0 0
    %418 = vmatpush1.bf16.msra.mxu0 0
    %419 = vmatprep.subr.bf16.mxu0 0
    %420 = vmatpush1.bf16.msra.mxu0 0
    %421 = vmatprep.subr.bf16.mxu0 0
    %422 = vmatpush1.bf16.msra.mxu0 0
    %423 = vmatprep.subr.bf16.mxu0 0
    %424 = vmatpush1.bf16.msra.mxu0 0
    %425 = vmatprep.subr.bf16.mxu0 0
    %426 = vmatpush1.bf16.msra.mxu0 0
    %427 = vmatprep.subr.bf16.mxu0 0
    %428 = vmatpush1.bf16.msra.mxu0 0
    %429 = vmatprep.mubr.bf16.mxu0 0
    %430 = vmatmul.mubr.bf16.gmra.mrb[0].mxu0 %v352
    %v431 = vpop.f32.mrb[0].mxu0
    %v432 = vadd.f32 %v297, %v431
    %v433 = vpop.f32.mrb[0].mxu0
    %v434 = vadd.f32 %v299, %v433
    %v435 = vpop.f32.mrb[0].mxu0
    %v436 = vadd.f32 %v301, %v435
    %v437 = vpop.f32.mrb[0].mxu0
    %v438 = vadd.f32 %v303, %v437
    %439 = vdwg.mxu0
    %v440 = vld [vmem:[%s4] sm:$0xf]
    %v442 = vlaneseq
    %v443 = vshrl.u32 %v442, 7
    %v444 = vsub.s32 0, %v443
    %v445 = vrot.slane %v440, %v444
    %v446 = vlaneseq
    %v447 = vshrl.u32 %v446, 7
    %v448 = vsub.s32 1, %v447
    %v449 = vrot.slane %v440, %v448
    %v450 = vlaneseq
    %v451 = vshrl.u32 %v450, 7
    %v452 = vsub.s32 2, %v451
    %v453 = vrot.slane %v440, %v452
    %v454 = vlaneseq
    %v455 = vshrl.u32 %v454, 7
    %v456 = vsub.s32 3, %v455
    %v457 = vrot.slane %v440, %v456
    %v462 = vadd.f32 %v389, %v445
    %v463 = vadd.f32 %v391, %v449
    %v464 = vadd.f32 %v432, %v453
    %v465 = vadd.f32 %v434, %v457
    %v466 = vadd.f32 %v393, %v445
    %v467 = vadd.f32 %v395, %v449
    %v468 = vadd.f32 %v436, %v453
    %v469 = vadd.f32 %v438, %v457
    %v470 = vtanh.pop %v462
    %v471 = vtanh.pop %v463
    %v472 = vtanh.pop %v464
    %v473 = vtanh.pop %v465
    %v474 = vtanh.pop %v466
    %v475 = vtanh.pop %v467
    %v476 = vtanh.pop %v468
    %v477 = vtanh.pop %v469
    %v478 = vadd.f32 %v470, %v471
    %v479 = vadd.f32 %v478, %v472
    %v480 = vadd.f32 %v479, %v473
    %481 = vadd.xlane.f32.xlu0 %v480
    %v482 = vpop.xlane.xlu0 %481
    %v483 = vadd.f32 %v474, %v475
    %v484 = vadd.f32 %v483, %v476
    %v485 = vadd.f32 %v484, %v477
    %486 = vadd.xlane.f32.xlu0 %v485
    %v487 = vpop.xlane.xlu0 %486
    %v488 = vrcp.pop 512.0
    %v489 = vmul.f32 %v482, %v488
    %v490 = vmul.f32 %v487, %v488
    %v491 = vmul.f32 %v470, %v470
    %v492 = vmul.f32 %v471, %v471
    %v493 = vmul.f32 %v472, %v472
    %v494 = vmul.f32 %v473, %v473
    %v495 = vmul.f32 %v474, %v474
    %v496 = vmul.f32 %v475, %v475
    %v497 = vmul.f32 %v476, %v476
    %v498 = vmul.f32 %v477, %v477
    %v499 = vadd.f32 %v491, %v492
    %v500 = vadd.f32 %v499, %v493
    %v501 = vadd.f32 %v500, %v494
    %502 = vadd.xlane.f32.xlu0 %v501
    %v503 = vpop.xlane.xlu0 %502
    %v504 = vadd.f32 %v495, %v496
    %v505 = vadd.f32 %v504, %v497
    %v506 = vadd.f32 %v505, %v498
    %507 = vadd.xlane.f32.xlu0 %v506
    %v508 = vpop.xlane.xlu0 %507
    %v509 = vmul.f32 %v503, %v488
    %v510 = vmul.f32 %v508, %v488
    %v511 = vmul.f32 %v489, %v489
    %v512 = vmul.f32 %v490, %v490
    %v513 = vsub.f32 %v509, %v511
    %v514 = vsub.f32 %v510, %v512
    %v515 = vadd.f32 %v513, 1e-05
    %v516 = vadd.f32 %v514, 1e-05
    %v517 = vrsqrt.pop %v515
    %v518 = vrsqrt.pop %v516
    %v519 = vsub.f32 %v470, %v489
    %v520 = vsub.f32 %v471, %v489
    %v521 = vsub.f32 %v472, %v489
    %v522 = vsub.f32 %v473, %v489
    %v523 = vsub.f32 %v474, %v490
    %v524 = vsub.f32 %v475, %v490
    %v525 = vsub.f32 %v476, %v490
    %v526 = vsub.f32 %v477, %v490
    %v527 = vmul.f32 %v519, %v517
    %v528 = vmul.f32 %v520, %v517
    %v529 = vmul.f32 %v521, %v517
    %v530 = vmul.f32 %v522, %v517
    %v531 = vmul.f32 %v523, %v518
    %v532 = vmul.f32 %v524, %v518
    %v533 = vmul.f32 %v525, %v518
    %v534 = vmul.f32 %v526, %v518
    %v535 = vld [vmem:[%s5] sm:$0xf]
    %v537 = vlaneseq
    %v538 = vshrl.u32 %v537, 7
    %v539 = vsub.s32 0, %v538
    %v540 = vrot.slane %v535, %v539
    %v541 = vlaneseq
    %v542 = vshrl.u32 %v541, 7
    %v543 = vsub.s32 1, %v542
    %v544 = vrot.slane %v535, %v543
    %v545 = vlaneseq
    %v546 = vshrl.u32 %v545, 7
    %v547 = vsub.s32 2, %v546
    %v548 = vrot.slane %v535, %v547
    %v549 = vlaneseq
    %v550 = vshrl.u32 %v549, 7
    %v551 = vsub.s32 3, %v550
    %v552 = vrot.slane %v535, %v551
    %v557 = vmul.f32 %v527, %v540
    %v558 = vmul.f32 %v528, %v544
    %v559 = vmul.f32 %v529, %v548
    %v560 = vmul.f32 %v530, %v552
    %v561 = vmul.f32 %v531, %v540
    %v562 = vmul.f32 %v532, %v544
    %v563 = vmul.f32 %v533, %v548
    %v564 = vmul.f32 %v534, %v552
    %v565 = vld [vmem:[%s6] sm:$0xf]
    %v567 = vlaneseq
    %v568 = vshrl.u32 %v567, 7
    %v569 = vsub.s32 0, %v568
    %v570 = vrot.slane %v565, %v569
    %v571 = vlaneseq
    %v572 = vshrl.u32 %v571, 7
    %v573 = vsub.s32 1, %v572
    %v574 = vrot.slane %v565, %v573
    %v575 = vlaneseq
    %v576 = vshrl.u32 %v575, 7
    %v577 = vsub.s32 2, %v576
    %v578 = vrot.slane %v565, %v577
    %v579 = vlaneseq
    %v580 = vshrl.u32 %v579, 7
    %v581 = vsub.s32 3, %v580
    %v582 = vrot.slane %v565, %v581
    %v587 = vadd.f32 %v557, %v570
    %v588 = vadd.f32 %v558, %v574
    %v589 = vadd.f32 %v559, %v578
    %v590 = vadd.f32 %v560, %v582
    %v591 = vadd.f32 %v561, %v570
    %v592 = vadd.f32 %v562, %v574
    %v593 = vadd.f32 %v563, %v578
    %v594 = vadd.f32 %v564, %v582
    %v595 = vpack.c.bf16 %v591, %v587
    %v596 = vpack.c.bf16 %v592, %v588
    %v597 = vpack.c.bf16 %v593, %v589
    %v598 = vpack.c.bf16 %v594, %v590
    %v599 = vld [vmem:[#allocation10] sm:$0xf]
    %v600 = vld [vmem:[#allocation10 + $0x4] sm:$0xf]
    %v601 = vld [vmem:[#allocation10 + $0x8] sm:$0xf]
    %v602 = vld [vmem:[#allocation10 + $0xc] sm:$0xf]
    %v603 = vld [vmem:[#allocation10 + $0x10] sm:$0xf]
    %v604 = vld [vmem:[#allocation10 + $0x14] sm:$0xf]
    %v605 = vld [vmem:[#allocation10 + $0x18] sm:$0xf]
    %v606 = vld [vmem:[#allocation10 + $0x1c] sm:$0xf]
    %v607 = vld [vmem:[#allocation10 + $0x20] sm:$0xf]
    %v608 = vld [vmem:[#allocation10 + $0x24] sm:$0xf]
    %v609 = vld [vmem:[#allocation10 + $0x28] sm:$0xf]
    %v610 = vld [vmem:[#allocation10 + $0x2c] sm:$0xf]
    %v611 = vld [vmem:[#allocation10 + $0x30] sm:$0xf]
    %v612 = vld [vmem:[#allocation10 + $0x34] sm:$0xf]
    %v613 = vld [vmem:[#allocation10 + $0x38] sm:$0xf]
    %v614 = vld [vmem:[#allocation10 + $0x3c] sm:$0xf]
    %v615 = vld [vmem:[#allocation10 + $0x40] sm:$0xf]
    %v616 = vld [vmem:[#allocation10 + $0x44] sm:$0xf]
    %v617 = vld [vmem:[#allocation10 + $0x48] sm:$0xf]
    %v618 = vld [vmem:[#allocation10 + $0x4c] sm:$0xf]
    %v619 = vld [vmem:[#allocation10 + $0x50] sm:$0xf]
    %v620 = vld [vmem:[#allocation10 + $0x54] sm:$0xf]
    %v621 = vld [vmem:[#allocation10 + $0x58] sm:$0xf]
    %v622 = vld [vmem:[#allocation10 + $0x5c] sm:$0xf]
    %v623 = vld [vmem:[#allocation10 + $0x60] sm:$0xf]
    %v624 = vld [vmem:[#allocation10 + $0x64] sm:$0xf]
    %v625 = vld [vmem:[#allocation10 + $0x68] sm:$0xf]
    %v626 = vld [vmem:[#allocation10 + $0x6c] sm:$0xf]
    %v627 = vld [vmem:[#allocation10 + $0x70] sm:$0xf]
    %v628 = vld [vmem:[#allocation10 + $0x74] sm:$0xf]
    %v629 = vld [vmem:[#allocation10 + $0x78] sm:$0xf]
    %v630 = vld [vmem:[#allocation10 + $0x7c] sm:$0xf]
    %v631 = vld [vmem:[#allocation10 + $0x80] sm:$0xf]
    %v632 = vld [vmem:[#allocation10 + $0x84] sm:$0xf]
    %v633 = vld [vmem:[#allocation10 + $0x88] sm:$0xf]
    %v634 = vld [vmem:[#allocation10 + $0x8c] sm:$0xf]
    %v635 = vld [vmem:[#allocation10 + $0x90] sm:$0xf]
    %v636 = vld [vmem:[#allocation10 + $0x94] sm:$0xf]
    %v637 = vld [vmem:[#allocation10 + $0x98] sm:$0xf]
    %v638 = vld [vmem:[#allocation10 + $0x9c] sm:$0xf]
    %v639 = vld [vmem:[#allocation10 + $0xa0] sm:$0xf]
    %v640 = vld [vmem:[#allocation10 + $0xa4] sm:$0xf]
    %v641 = vld [vmem:[#allocation10 + $0xa8] sm:$0xf]
    %v642 = vld [vmem:[#allocation10 + $0xac] sm:$0xf]
    %v643 = vld [vmem:[#allocation10 + $0xb0] sm:$0xf]
    %v644 = vld [vmem:[#allocation10 + $0xb4] sm:$0xf]
    %v645 = vld [vmem:[#allocation10 + $0xb8] sm:$0xf]
    %v646 = vld [vmem:[#allocation10 + $0xbc] sm:$0xf]
    %v647 = vld [vmem:[#allocation10 + $0xc0] sm:$0xf]
    %v648 = vld [vmem:[#allocation10 + $0xc4] sm:$0xf]
    %v649 = vld [vmem:[#allocation10 + $0xc8] sm:$0xf]
    %v650 = vld [vmem:[#allocation10 + $0xcc] sm:$0xf]
    %v651 = vld [vmem:[#allocation10 + $0xd0] sm:$0xf]
    %v652 = vld [vmem:[#allocation10 + $0xd4] sm:$0xf]
    %v653 = vld [vmem:[#allocation10 + $0xd8] sm:$0xf]
    %v654 = vld [vmem:[#allocation10 + $0xdc] sm:$0xf]
    %v655 = vld [vmem:[#allocation10 + $0xe0] sm:$0xf]
    %v656 = vld [vmem:[#allocation10 + $0xe4] sm:$0xf]
    %v657 = vld [vmem:[#allocation10 + $0xe8] sm:$0xf]
    %v658 = vld [vmem:[#allocation10 + $0xec] sm:$0xf]
    %v659 = vld [vmem:[#allocation10 + $0xf0] sm:$0xf]
    %v660 = vld [vmem:[#allocation10 + $0xf4] sm:$0xf]
    %v661 = vld [vmem:[#allocation10 + $0xf8] sm:$0xf]
    %v662 = vld [vmem:[#allocation10 + $0xfc] sm:$0xf]
    %v663 = vld [vmem:[%s8] sm:$0x1]
    %v665 = vlaneseq
    %v666 = vshrl.u32 %v665, 7
    %v667 = vsub.s32 0, %v666
    %v668 = vrot.slane %v663, %v667
    %v734 = vunpack.c.l.b16 %v599
    %v735 = vunpack.c.l.b16 %v600
    %v736 = vunpack.c.l.b16 %v601
    %v737 = vunpack.c.l.b16 %v602
    %v738 = vunpack.c.l.b16 %v603
    %v739 = vunpack.c.l.b16 %v604
    %v740 = vunpack.c.l.b16 %v605
    %v741 = vunpack.c.l.b16 %v606
    %v742 = vunpack.c.l.b16 %v607
    %v743 = vunpack.c.l.b16 %v608
    %v744 = vunpack.c.l.b16 %v609
    %v745 = vunpack.c.l.b16 %v610
    %v746 = vunpack.c.l.b16 %v611
    %v747 = vunpack.c.l.b16 %v612
    %v748 = vunpack.c.l.b16 %v613
    %v749 = vunpack.c.l.b16 %v614
    %v750 = vunpack.c.l.b16 %v615
    %v751 = vunpack.c.l.b16 %v616
    %v752 = vunpack.c.l.b16 %v617
    %v753 = vunpack.c.l.b16 %v618
    %v754 = vunpack.c.l.b16 %v619
    %v755 = vunpack.c.l.b16 %v620
    %v756 = vunpack.c.l.b16 %v621
    %v757 = vunpack.c.l.b16 %v622
    %v758 = vunpack.c.l.b16 %v623
    %v759 = vunpack.c.l.b16 %v624
    %v760 = vunpack.c.l.b16 %v625
    %v761 = vunpack.c.l.b16 %v626
    %v762 = vunpack.c.l.b16 %v627
    %v763 = vunpack.c.l.b16 %v628
    %v764 = vunpack.c.l.b16 %v629
    %v765 = vunpack.c.l.b16 %v630
    %v766 = vunpack.c.l.b16 %v631
    %v767 = vunpack.c.l.b16 %v632
    %v768 = vunpack.c.l.b16 %v633
    %v769 = vunpack.c.l.b16 %v634
    %v770 = vunpack.c.l.b16 %v635
    %v771 = vunpack.c.l.b16 %v636
    %v772 = vunpack.c.l.b16 %v637
    %v773 = vunpack.c.l.b16 %v638
    %v774 = vunpack.c.l.b16 %v639
    %v775 = vunpack.c.l.b16 %v640
    %v776 = vunpack.c.l.b16 %v641
    %v777 = vunpack.c.l.b16 %v642
    %v778 = vunpack.c.l.b16 %v643
    %v779 = vunpack.c.l.b16 %v644
    %v780 = vunpack.c.l.b16 %v645
    %v781 = vunpack.c.l.b16 %v646
    %v782 = vunpack.c.l.b16 %v647
    %v783 = vunpack.c.l.b16 %v648
    %v784 = vunpack.c.l.b16 %v649
    %v785 = vunpack.c.l.b16 %v650
    %v786 = vunpack.c.l.b16 %v651
    %v787 = vunpack.c.l.b16 %v652
    %v788 = vunpack.c.l.b16 %v653
    %v789 = vunpack.c.l.b16 %v654
    %v790 = vunpack.c.l.b16 %v655
    %v791 = vunpack.c.l.b16 %v656
    %v792 = vunpack.c.l.b16 %v657
    %v793 = vunpack.c.l.b16 %v658
    %v794 = vunpack.c.l.b16 %v659
    %v795 = vunpack.c.l.b16 %v660
    %v796 = vunpack.c.l.b16 %v661
    %v797 = vunpack.c.l.b16 %v662
    %v798 = vpack.c.b16 %v735, %v734
    %v799 = vpack.c.b16 %v737, %v736
    %v800 = vpack.c.b16 %v739, %v738
    %v801 = vpack.c.b16 %v741, %v740
    %v802 = vpack.c.b16 %v743, %v742
    %v803 = vpack.c.b16 %v745, %v744
    %v804 = vpack.c.b16 %v747, %v746
    %v805 = vpack.c.b16 %v749, %v748
    %v806 = vpack.c.b16 %v751, %v750
    %v807 = vpack.c.b16 %v753, %v752
    %v808 = vpack.c.b16 %v755, %v754
    %v809 = vpack.c.b16 %v757, %v756
    %v810 = vpack.c.b16 %v759, %v758
    %v811 = vpack.c.b16 %v761, %v760
    %v812 = vpack.c.b16 %v763, %v762
    %v813 = vpack.c.b16 %v765, %v764
    %v814 = vpack.c.b16 %v767, %v766
    %v815 = vpack.c.b16 %v769, %v768
    %v816 = vpack.c.b16 %v771, %v770
    %v817 = vpack.c.b16 %v773, %v772
    %v818 = vpack.c.b16 %v775, %v774
    %v819 = vpack.c.b16 %v777, %v776
    %v820 = vpack.c.b16 %v779, %v778
    %v821 = vpack.c.b16 %v781, %v780
    %v822 = vpack.c.b16 %v783, %v782
    %v823 = vpack.c.b16 %v785, %v784
    %v824 = vpack.c.b16 %v787, %v786
    %v825 = vpack.c.b16 %v789, %v788
    %v826 = vpack.c.b16 %v791, %v790
    %v827 = vpack.c.b16 %v793, %v792
    %v828 = vpack.c.b16 %v795, %v794
    %v829 = vpack.c.b16 %v797, %v796
    %862 = vmatprep.subr.bf16.mxu0 0
    %863 = vmatpush1.bf16.msra.mxu0 %v798
    %864 = vmatprep.subr.bf16.mxu0 0
    %865 = vmatpush1.bf16.msra.mxu0 %v799
    %866 = vmatprep.subr.bf16.mxu0 0
    %867 = vmatpush1.bf16.msra.mxu0 %v800
    %868 = vmatprep.subr.bf16.mxu0 0
    %869 = vmatpush1.bf16.msra.mxu0 %v801
    %870 = vmatprep.subr.bf16.mxu0 0
    %871 = vmatpush1.bf16.msra.mxu0 %v802
    %872 = vmatprep.subr.bf16.mxu0 0
    %873 = vmatpush1.bf16.msra.mxu0 %v803
    %874 = vmatprep.subr.bf16.mxu0 0
    %875 = vmatpush1.bf16.msra.mxu0 %v804
    %876 = vmatprep.subr.bf16.mxu0 0
    %877 = vmatpush1.bf16.msra.mxu0 %v805
    %878 = vmatprep.subr.bf16.mxu0 0
    %879 = vmatpush1.bf16.msra.mxu0 %v806
    %880 = vmatprep.subr.bf16.mxu0 0
    %881 = vmatpush1.bf16.msra.mxu0 %v807
    %882 = vmatprep.subr.bf16.mxu0 0
    %883 = vmatpush1.bf16.msra.mxu0 %v808
    %884 = vmatprep.subr.bf16.mxu0 0
    %885 = vmatpush1.bf16.msra.mxu0 %v809
    %886 = vmatprep.subr.bf16.mxu0 0
    %887 = vmatpush1.bf16.msra.mxu0 %v810
    %888 = vmatprep.subr.bf16.mxu0 0
    %889 = vmatpush1.bf16.msra.mxu0 %v811
    %890 = vmatprep.subr.bf16.mxu0 0
    %891 = vmatpush1.bf16.msra.mxu0 %v812
    %892 = vmatprep.subr.bf16.mxu0 0
    %893 = vmatpush1.bf16.msra.mxu0 %v813
    %894 = vmatprep.mubr.bf16.mxu0 %v596
    %895 = vmatmul.mubr.bf16.gmra.mrb[0].mxu0 %v595
    %v896 = vpop.f32.mrb[0].mxu0
    %v897 = vadd.f32 %v668, %v896
    %v898 = vpop.f32.mrb[0].mxu0
    %v899 = vpop.f32.mrb[0].mxu0
    %v900 = vadd.f32 %v668, %v899
    %v901 = vpop.f32.mrb[0].mxu0
    %902 = vdwg.mxu0
    %903 = vmatprep.subr.bf16.mxu0 0
    %904 = vmatpush1.bf16.msra.mxu0 %v814
    %905 = vmatprep.subr.bf16.mxu0 0
    %906 = vmatpush1.bf16.msra.mxu0 %v815
    %907 = vmatprep.subr.bf16.mxu0 0
    %908 = vmatpush1.bf16.msra.mxu0 %v816
    %909 = vmatprep.subr.bf16.mxu0 0
    %910 = vmatpush1.bf16.msra.mxu0 %v817
    %911 = vmatprep.subr.bf16.mxu0 0
    %912 = vmatpush1.bf16.msra.mxu0 %v818
    %913 = vmatprep.subr.bf16.mxu0 0
    %914 = vmatpush1.bf16.msra.mxu0 %v819
    %915 = vmatprep.subr.bf16.mxu0 0
    %916 = vmatpush1.bf16.msra.mxu0 %v820
    %917 = vmatprep.subr.bf16.mxu0 0
    %918 = vmatpush1.bf16.msra.mxu0 %v821
    %919 = vmatprep.subr.bf16.mxu0 0
    %920 = vmatpush1.bf16.msra.mxu0 %v822
    %921 = vmatprep.subr.bf16.mxu0 0
    %922 = vmatpush1.bf16.msra.mxu0 %v823
    %923 = vmatprep.subr.bf16.mxu0 0
    %924 = vmatpush1.bf16.msra.mxu0 %v824
    %925 = vmatprep.subr.bf16.mxu0 0
    %926 = vmatpush1.bf16.msra.mxu0 %v825
    %927 = vmatprep.subr.bf16.mxu0 0
    %928 = vmatpush1.bf16.msra.mxu0 %v826
    %929 = vmatprep.subr.bf16.mxu0 0
    %930 = vmatpush1.bf16.msra.mxu0 %v827
    %931 = vmatprep.subr.bf16.mxu0 0
    %932 = vmatpush1.bf16.msra.mxu0 %v828
    %933 = vmatprep.subr.bf16.mxu0 0
    %934 = vmatpush1.bf16.msra.mxu0 %v829
    %935 = vmatprep.mubr.bf16.mxu0 %v598
    %936 = vmatmul.mubr.bf16.gmra.mrb[0].mxu0 %v597
    %v937 = vpop.f32.mrb[0].mxu0
    %v938 = vadd.f32 %v897, %v937
    %v939 = vpop.f32.mrb[0].mxu0
    %v940 = vpop.f32.mrb[0].mxu0
    %v941 = vadd.f32 %v900, %v940
    %v942 = vpop.f32.mrb[0].mxu0
    %943 = vdwg.mxu0
    %944 = vst [vmem:[#allocation11] sm:$0xff] %v938
    %945 = vst [vmem:[#allocation11 + $0x8] sm:$0xff] %v941
    // Predicated region
    $region58: #{tpu_custom_call.1} parent=1 // pred_check
      _
    $region59: #{tpu_custom_call.1} parent=1 // pred_check_branch
      %947 = sbr.rel (0) target = $region61
    $region60: #{tpu_custom_call.1} parent=1 // pred_region
      %s949 = ssub.s32 256, 256
      %950 = vsyncadd [#allocation4], %s949
      %s951 = sshll.u32 [#allocation11], 4
      %s952 = int_to_ptr.vmem [resolvable:$true] %s951
      %957 = dma.vmem_to_hbm [thread:$0]  %s952, 256, %s9, [#allocation4], 128, 128, 8
    $region61: #{tpu_custom_call.1} parent=1 // pred_fallthru
      _
    // Predicated region
    $region62: #{tpu_custom_call.1} parent=1 // pred_check
      _
    $region63: #{tpu_custom_call.1} parent=1 // pred_check_branch
      %959 = sbr.rel (0) target = $region65
    $region64: #{tpu_custom_call.1} parent=1 // pred_region
      %960 = dma.done [#allocation4], 256
    $region65: #{tpu_custom_call.1} parent=1 // pred_fallthru
      _
    %961 = vsyncpa [#allocation3], 1
    %962 = vsyncpa [#allocation6], 1
    %963 = vsyncpa [#allocation9], 1
    %964 = vsyncpa [#allocation4], 1

</llo_original>
